<compile_context>
chip_gen: v6e
topology: v6e:2x2x1
jax: 0.10.0
libtpu: 0.0.40
codegen_flags: <defaults>
</compile_context>

<pallas_src>
import functools

import jax
import jax.numpy as jnp
from jax import lax
from jax.experimental import pallas as pl
from jax.experimental.pallas import tpu as pltpu

NEG_INF = float(-2 ** 32 + 1)  # self.inf in the PyTorch module


# ----------------------------------------------------------------------------
# Fused MHA kernel (one batch group per grid step, all heads per step).
#   x block    : (GB, T, d_model)
#   wqkv/bqkv  : (d_model, 2*h*qd + h*vd) / (1, 2*h*qd + h*vd)
#   wo/bo      : (h*vd, d_model) / (1, d_model)
#   heat block : (h, GB, T, T)   (head-major -> free reshape to (h*B, T, T))
#   out block  : (GB, T, d_model)
# ----------------------------------------------------------------------------
def _mha_kernel(training, h, qd, vd, with_heat,
                x_ref, wqkv_ref, bqkv_ref, wo_ref, bo_ref, *out_refs):
    if with_heat:
        heat_ref, out_ref = out_refs
    else:
        (out_ref,) = out_refs

    GB, T, d_model = x_ref.shape
    Dq = h * qd
    Dtot = wqkv_ref.shape[1]

    # Fused Q|K|V projection: one wide MXU matmul, x read once.
    x2 = x_ref[...].reshape(GB * T, d_model)
    qkv = (jnp.dot(x2, wqkv_ref[...], preferred_element_type=jnp.float32)
           + bqkv_ref[...]).reshape(GB, T, Dtot)

    if training:
        row = lax.broadcasted_iota(jnp.int32, (T, T), 0)
        col = lax.broadcasted_iota(jnp.int32, (T, T), 1)
        keep = (col <= row)[None, :, :]   # (1, T, T) broadcasts over the group

    ctx_heads = []
    for hh in range(h):
        q = qkv[:, :, hh * qd:(hh + 1) * qd]                    # (GB, T, qd)
        k = qkv[:, :, Dq + hh * qd:Dq + (hh + 1) * qd]          # (GB, T, qd)
        v = qkv[:, :, 2 * Dq + hh * vd:2 * Dq + (hh + 1) * vd]  # (GB, T, vd)

        # Contract last dims directly (no materialized K^T).
        s = jnp.einsum("btd,bsd->bts", q, k,
                       preferred_element_type=jnp.float32)      # (GB, T, T)
        if with_heat:
            heat_ref[hh] = s    # heatmap_score: pre-mask, pre-softmax

        if training:
            s = jnp.where(keep, s, jnp.float32(NEG_INF))

        # Numerically-stable softmax; normalize via EUP reciprocal (free slot).
        s = s - jnp.max(s, axis=-1, keepdims=True)
        e = jnp.exp(s)
        p = e * pl.reciprocal(jnp.sum(e, axis=-1, keepdims=True), approx=True)

        ctx_heads.append(jnp.einsum("bts,bsd->btd", p, v,
                                    preferred_element_type=jnp.float32))

    ctx = jnp.concatenate(ctx_heads, axis=-1)                   # (GB, T, h*vd)

    # Output projection fused in-kernel: context never hits HBM.
    out2 = (jnp.dot(ctx.reshape(GB * T, h * vd), wo_ref[...],
                    preferred_element_type=jnp.float32) + bo_ref[...])
    out_ref[...] = out2.reshape(GB, T, d_model)


def _pick_group(B, max_g=8):
    """Largest batch-group size dividing B that keeps >=2 grid steps
    (so a multi-TensorCore chip gets work on both cores)."""
    best = None
    for g in range(1, min(max_g, B) + 1):
        if B % g == 0 and B // g >= 2:
            best = g
    return best if best is not None else B


# ----------------------------------------------------------------------------
# Full forward pass
# ----------------------------------------------------------------------------
def multi_head_attention(x, params, h, training=True, with_heat=True, group=None):
    """Returns (out, heatmap_score) matching the PyTorch module.

    out: (B, T, d_model); heatmap_score: (h*B, T, T) (or None if with_heat=False).
    training=True matches a freshly constructed nn.Module (causal mask on).
    """
    B, T, d_model = x.shape
    qd = params["wq"].shape[1] // h
    vd = params["wv"].shape[1] // h

    # Fused projection weights (cheap one-time concat under jit).
    wqkv = jnp.concatenate([params["wq"], params["wk"], params["wv"]], axis=1)
    bqkv = jnp.concatenate([params["bq"], params["bk"], params["bv"]], axis=1)
    Dtot = wqkv.shape[1]

    if group is None:
        group = _pick_group(B)
    grid = (B // group,)

    kernel = functools.partial(_mha_kernel, training, h, qd, vd, with_heat)

    out_shapes = []
    out_specs = []
    if with_heat:
        out_shapes.append(jax.ShapeDtypeStruct((h, B, T, T), jnp.float32))
        out_specs.append(pl.BlockSpec((h, group, T, T), lambda i: (0, i, 0, 0)))
    out_shapes.append(jax.ShapeDtypeStruct((B, T, d_model), jnp.float32))
    out_specs.append(pl.BlockSpec((group, T, d_model), lambda i: (i, 0, 0)))

    results = pl.pallas_call(
        kernel,
        out_shape=tuple(out_shapes),
        grid=grid,
        in_specs=[
            pl.BlockSpec((group, T, d_model), lambda i: (i, 0, 0)),
            pl.BlockSpec((d_model, Dtot), lambda i: (0, 0)),
            pl.BlockSpec((1, Dtot), lambda i: (0, 0)),
            pl.BlockSpec((h * vd, d_model), lambda i: (0, 0)),
            pl.BlockSpec((1, d_model), lambda i: (0, 0)),
        ],
        out_specs=tuple(out_specs),
        compiler_params=pltpu.CompilerParams(
            dimension_semantics=("parallel",)
        ),
    )(x, wqkv, bqkv, params["wo"], params["bo"])

    if with_heat:
        heat4, out = results
        # (h, B, T, T) -> (h*B, T, T): row index = head*B + batch
        # (torch.cat(chunk(..., dim=-1), dim=0) ordering).
        heat = heat4.reshape(h * B, T, T)
    else:
        (out,) = results
        heat = None
    return out, heat


def init_params(key, d_model, q, v, h):
    """Deterministic params; mimics nn.Linear's U(-1/sqrt(in), 1/sqrt(in)) init.

    Weights stored as (in_features, out_features) so kernels compute x @ W + b
    (equivalent to torch's x @ W_t.T + b).
    """
    def lin(k, fan_in, fan_out):
        kw, kb = jax.random.split(k)
        bound = 1.0 / jnp.sqrt(fan_in)
        w = jax.random.uniform(kw, (fan_in, fan_out), jnp.float32, -bound, bound)
        b = jax.random.uniform(kb, (1, fan_out), jnp.float32, -bound, bound)
        return w, b

    kq, kk, kv, ko = jax.random.split(key, 4)
    wq, bq = lin(kq, d_model, q * h)
    wk, bk = lin(kk, d_model, q * h)
    wv, bv = lin(kv, d_model, v * h)
    wo, bo = lin(ko, v * h, d_model)
    return dict(wq=wq, bq=bq, wk=wk, bk=bk, wv=wv, bv=bv, wo=wo, bo=bo)


if __name__ == "__main__":
    B, T, d_model = 2, 8, 32
    q_dim, v_dim, h = 8, 8, 4

    key = jax.random.PRNGKey(0)
    kx, kp = jax.random.split(key)
    x = jax.random.normal(kx, (B, T, d_model), jnp.float32)
    params = init_params(kp, d_model, q_dim, v_dim, h)

    fwd = jax.jit(functools.partial(multi_head_attention, h=h, training=True))
    out, heat = fwd(x, params)
    jax.block_until_ready((out, heat))

    assert out.shape == (B, T, d_model)
    assert heat.shape == (h * B, T, T)
    assert bool(jnp.all(jnp.isfinite(out))) and bool(jnp.all(jnp.isfinite(heat)))
    print("KERNEL_OK")
</pallas_src>

<mosaic_0001>
module attributes {stable_mosaic.version = 11 : i64} {
  func.func @_mha_kernel(%arg0: i32, %arg1: memref<1x8x32xf32, #tpu.memory_space<vmem>>, %arg2: memref<32x96xf32, #tpu.memory_space<vmem>>, %arg3: memref<1x96xf32, #tpu.memory_space<vmem>>, %arg4: memref<32x32xf32, #tpu.memory_space<vmem>>, %arg5: memref<1x32xf32, #tpu.memory_space<vmem>>, %arg6: memref<4x1x8x8xf32, #tpu.memory_space<vmem>>, %arg7: memref<1x8x32xf32, #tpu.memory_space<vmem>>) attributes {dimension_semantics = [#tpu.dimension_semantics<parallel>], iteration_bounds = array<i64: 2>, scalar_prefetch = 0 : i64, scratch_operands = 0 : i64, tpu.core_type = #tpu.core_type<tc>, window_params = [{transform_indices = @transform_0, window_bounds = array<i64: 1, 8, 32>}, {pipeline_mode = #tpu.pipeline_mode<synchronous>, transform_indices = @transform_1, window_bounds = array<i64: 32, 96>}, {pipeline_mode = #tpu.pipeline_mode<synchronous>, transform_indices = @transform_2, window_bounds = array<i64: 1, 96>}, {pipeline_mode = #tpu.pipeline_mode<synchronous>, transform_indices = @transform_3, window_bounds = array<i64: 32, 32>}, {pipeline_mode = #tpu.pipeline_mode<synchronous>, transform_indices = @transform_4, window_bounds = array<i64: 1, 32>}, {transform_indices = @transform_5, window_bounds = array<i64: 4, 1, 8, 8>}, {transform_indices = @transform_6, window_bounds = array<i64: 1, 8, 32>}]} {
    %c0 = arith.constant 0 : index
    %c0_0 = arith.constant 0 : index
    %c0_1 = arith.constant 0 : index
    %0 = vector.load %arg1[%c0, %c0_0, %c0_1] : memref<1x8x32xf32, #tpu.memory_space<vmem>>, vector<1x8x32xf32>
    %1 = vector.shape_cast %0 : vector<1x8x32xf32> to vector<8x32xf32>
    %c0_2 = arith.constant 0 : index
    %c0_3 = arith.constant 0 : index
    %2 = vector.load %arg2[%c0_2, %c0_3] : memref<32x96xf32, #tpu.memory_space<vmem>>, vector<32x96xf32>
    %cst = arith.constant dense<0.000000e+00> : vector<8x96xf32>
    %3 = tpu.matmul %1, %2, %cst {dimension_numbers = #tpu.dot_dimension_numbers<[1], [0], [0], [1], [0, 0, 1, 1], [], []>} : vector<8x32xf32>, vector<32x96xf32>, vector<8x96xf32> -> vector<8x96xf32>
    %c0_4 = arith.constant 0 : index
    %c0_5 = arith.constant 0 : index
    %4 = vector.load %arg3[%c0_4, %c0_5] : memref<1x96xf32, #tpu.memory_space<vmem>>, vector<1x96xf32>
    %5 = vector.broadcast %4 : vector<1x96xf32> to vector<8x96xf32>
    %6 = arith.addf %3, %5 : vector<8x96xf32>
    %7 = vector.shape_cast %6 : vector<8x96xf32> to vector<1x8x96xf32>
    %8 = tpu.iota {dimensions = array<i32: 0>} : vector<8x8xi32>
    %9 = tpu.iota {dimensions = array<i32: 1>} : vector<8x8xi32>
    %10 = arith.cmpi sle, %9, %8 : vector<8x8xi32>
    %11 = vector.shape_cast %10 : vector<8x8xi1> to vector<1x8x8xi1>
    %12 = vector.extract_strided_slice %7 {offsets = [0, 0, 0], sizes = [1, 8, 8], strides = [1, 1, 1]} : vector<1x8x96xf32> to vector<1x8x8xf32>
    %13 = vector.extract_strided_slice %7 {offsets = [0, 0, 32], sizes = [1, 8, 8], strides = [1, 1, 1]} : vector<1x8x96xf32> to vector<1x8x8xf32>
    %14 = vector.extract_strided_slice %7 {offsets = [0, 0, 64], sizes = [1, 8, 8], strides = [1, 1, 1]} : vector<1x8x96xf32> to vector<1x8x8xf32>
    "tpu.trace_start"() <{level = 10 : i32, message = "btd,bsd->bts"}> : () -> ()
    %cst_6 = arith.constant dense<0.000000e+00> : vector<1x8x8xf32>
    %15 = tpu.matmul %12, %13, %cst_6 {dimension_numbers = #tpu.dot_dimension_numbers<[2], [2], [1], [1], [0, 0, 0, 1, 1, 1], [0], [0]>} : vector<1x8x8xf32>, vector<1x8x8xf32>, vector<1x8x8xf32> -> vector<1x8x8xf32>
    "tpu.trace_stop"() : () -> ()
    %c0_7 = arith.constant 0 : index
    %c0_8 = arith.constant 0 : index
    %c0_9 = arith.constant 0 : index
    %c0_10 = arith.constant 0 : index
    %16 = vector.load %arg6[%c0_7, %c0_8, %c0_9, %c0_10] : memref<4x1x8x8xf32, #tpu.memory_space<vmem>>, vector<1x1x8x8xf32>
    %17 = vector.shape_cast %16 : vector<1x1x8x8xf32> to vector<1x8x8xf32>
    %18 = vector.shape_cast %15 : vector<1x8x8xf32> to vector<1x1x8x8xf32>
    tpu.vector_store %arg6[%c0_7, %c0_8, %c0_9, %c0_10], %18 {strides = array<i32>} : memref<4x1x8x8xf32, #tpu.memory_space<vmem>>, vector<1x1x8x8xf32>,
    %cst_11 = arith.constant -4.2949673E+9 : f32
    %19 = vector.broadcast %cst_11 : f32 to vector<1x8x8xf32>
    %20 = arith.select %11, %15, %19 : vector<1x8x8xi1>, vector<1x8x8xf32>
    %cst_12 = arith.constant dense<0xFF800000> : vector<1x8xf32>
    %21 = vector.multi_reduction <maximumf>, %20, %cst_12 [2] : vector<1x8x8xf32> to vector<1x8xf32>
    %22 = vector.shape_cast %21 : vector<1x8xf32> to vector<1x8x1xf32>
    %23 = vector.broadcast %22 : vector<1x8x1xf32> to vector<1x8x8xf32>
    %24 = arith.subf %20, %23 : vector<1x8x8xf32>
    %25 = math.exp %24 : vector<1x8x8xf32>
    %cst_13 = arith.constant dense<0.000000e+00> : vector<1x8xf32>
    %26 = vector.multi_reduction <add>, %25, %cst_13 [2] : vector<1x8x8xf32> to vector<1x8xf32>
    %27 = vector.shape_cast %26 : vector<1x8xf32> to vector<1x8x1xf32>
    %28 = tpu.reciprocal %27 {approx = true} : vector<1x8x1xf32> -> vector<1x8x1xf32>
    %29 = vector.broadcast %28 : vector<1x8x1xf32> to vector<1x8x8xf32>
    %30 = arith.mulf %25, %29 : vector<1x8x8xf32>
    "tpu.trace_start"() <{level = 10 : i32, message = "bts,bsd->btd"}> : () -> ()
    %cst_14 = arith.constant dense<0.000000e+00> : vector<1x8x8xf32>
    %31 = tpu.matmul %30, %14, %cst_14 {dimension_numbers = #tpu.dot_dimension_numbers<[2], [1], [1], [2], [0, 0, 0, 1, 1, 2], [0], [0]>} : vector<1x8x8xf32>, vector<1x8x8xf32>, vector<1x8x8xf32> -> vector<1x8x8xf32>
    "tpu.trace_stop"() : () -> ()
    %32 = vector.extract_strided_slice %7 {offsets = [0, 0, 8], sizes = [1, 8, 8], strides = [1, 1, 1]} : vector<1x8x96xf32> to vector<1x8x8xf32>
    %33 = vector.extract_strided_slice %7 {offsets = [0, 0, 40], sizes = [1, 8, 8], strides = [1, 1, 1]} : vector<1x8x96xf32> to vector<1x8x8xf32>
    %34 = vector.extract_strided_slice %7 {offsets = [0, 0, 72], sizes = [1, 8, 8], strides = [1, 1, 1]} : vector<1x8x96xf32> to vector<1x8x8xf32>
    "tpu.trace_start"() <{level = 10 : i32, message = "btd,bsd->bts"}> : () -> ()
    %cst_15 = arith.constant dense<0.000000e+00> : vector<1x8x8xf32>
    %35 = tpu.matmul %32, %33, %cst_15 {dimension_numbers = #tpu.dot_dimension_numbers<[2], [2], [1], [1], [0, 0, 0, 1, 1, 1], [0], [0]>} : vector<1x8x8xf32>, vector<1x8x8xf32>, vector<1x8x8xf32> -> vector<1x8x8xf32>
    "tpu.trace_stop"() : () -> ()
    %c1 = arith.constant 1 : index
    %c0_16 = arith.constant 0 : index
    %c0_17 = arith.constant 0 : index
    %c0_18 = arith.constant 0 : index
    %36 = vector.load %arg6[%c1, %c0_16, %c0_17, %c0_18] : memref<4x1x8x8xf32, #tpu.memory_space<vmem>>, vector<1x1x8x8xf32>
    %37 = vector.shape_cast %36 : vector<1x1x8x8xf32> to vector<1x8x8xf32>
    %38 = vector.shape_cast %35 : vector<1x8x8xf32> to vector<1x1x8x8xf32>
    tpu.vector_store %arg6[%c1, %c0_16, %c0_17, %c0_18], %38 {strides = array<i32>} : memref<4x1x8x8xf32, #tpu.memory_space<vmem>>, vector<1x1x8x8xf32>,
    %cst_19 = arith.constant -4.2949673E+9 : f32
    %39 = vector.broadcast %cst_19 : f32 to vector<1x8x8xf32>
    %40 = arith.select %11, %35, %39 : vector<1x8x8xi1>, vector<1x8x8xf32>
    %cst_20 = arith.constant dense<0xFF800000> : vector<1x8xf32>
    %41 = vector.multi_reduction <maximumf>, %40, %cst_20 [2] : vector<1x8x8xf32> to vector<1x8xf32>
    %42 = vector.shape_cast %41 : vector<1x8xf32> to vector<1x8x1xf32>
    %43 = vector.broadcast %42 : vector<1x8x1xf32> to vector<1x8x8xf32>
    %44 = arith.subf %40, %43 : vector<1x8x8xf32>
    %45 = math.exp %44 : vector<1x8x8xf32>
    %cst_21 = arith.constant dense<0.000000e+00> : vector<1x8xf32>
    %46 = vector.multi_reduction <add>, %45, %cst_21 [2] : vector<1x8x8xf32> to vector<1x8xf32>
    %47 = vector.shape_cast %46 : vector<1x8xf32> to vector<1x8x1xf32>
    %48 = tpu.reciprocal %47 {approx = true} : vector<1x8x1xf32> -> vector<1x8x1xf32>
    %49 = vector.broadcast %48 : vector<1x8x1xf32> to vector<1x8x8xf32>
    %50 = arith.mulf %45, %49 : vector<1x8x8xf32>
    "tpu.trace_start"() <{level = 10 : i32, message = "bts,bsd->btd"}> : () -> ()
    %cst_22 = arith.constant dense<0.000000e+00> : vector<1x8x8xf32>
    %51 = tpu.matmul %50, %34, %cst_22 {dimension_numbers = #tpu.dot_dimension_numbers<[2], [1], [1], [2], [0, 0, 0, 1, 1, 2], [0], [0]>} : vector<1x8x8xf32>, vector<1x8x8xf32>, vector<1x8x8xf32> -> vector<1x8x8xf32>
    "tpu.trace_stop"() : () -> ()
    %52 = vector.extract_strided_slice %7 {offsets = [0, 0, 16], sizes = [1, 8, 8], strides = [1, 1, 1]} : vector<1x8x96xf32> to vector<1x8x8xf32>
    %53 = vector.extract_strided_slice %7 {offsets = [0, 0, 48], sizes = [1, 8, 8], strides = [1, 1, 1]} : vector<1x8x96xf32> to vector<1x8x8xf32>
    %54 = vector.extract_strided_slice %7 {offsets = [0, 0, 80], sizes = [1, 8, 8], strides = [1, 1, 1]} : vector<1x8x96xf32> to vector<1x8x8xf32>
    "tpu.trace_start"() <{level = 10 : i32, message = "btd,bsd->bts"}> : () -> ()
    %cst_23 = arith.constant dense<0.000000e+00> : vector<1x8x8xf32>
    %55 = tpu.matmul %52, %53, %cst_23 {dimension_numbers = #tpu.dot_dimension_numbers<[2], [2], [1], [1], [0, 0, 0, 1, 1, 1], [0], [0]>} : vector<1x8x8xf32>, vector<1x8x8xf32>, vector<1x8x8xf32> -> vector<1x8x8xf32>
    "tpu.trace_stop"() : () -> ()
    %c2 = arith.constant 2 : index
    %c0_24 = arith.constant 0 : index
    %c0_25 = arith.constant 0 : index
    %c0_26 = arith.constant 0 : index
    %56 = vector.load %arg6[%c2, %c0_24, %c0_25, %c0_26] : memref<4x1x8x8xf32, #tpu.memory_space<vmem>>, vector<1x1x8x8xf32>
    %57 = vector.shape_cast %56 : vector<1x1x8x8xf32> to vector<1x8x8xf32>
    %58 = vector.shape_cast %55 : vector<1x8x8xf32> to vector<1x1x8x8xf32>
    tpu.vector_store %arg6[%c2, %c0_24, %c0_25, %c0_26], %58 {strides = array<i32>} : memref<4x1x8x8xf32, #tpu.memory_space<vmem>>, vector<1x1x8x8xf32>,
    %cst_27 = arith.constant -4.2949673E+9 : f32
    %59 = vector.broadcast %cst_27 : f32 to vector<1x8x8xf32>
    %60 = arith.select %11, %55, %59 : vector<1x8x8xi1>, vector<1x8x8xf32>
    %cst_28 = arith.constant dense<0xFF800000> : vector<1x8xf32>
    %61 = vector.multi_reduction <maximumf>, %60, %cst_28 [2] : vector<1x8x8xf32> to vector<1x8xf32>
    %62 = vector.shape_cast %61 : vector<1x8xf32> to vector<1x8x1xf32>
    %63 = vector.broadcast %62 : vector<1x8x1xf32> to vector<1x8x8xf32>
    %64 = arith.subf %60, %63 : vector<1x8x8xf32>
    %65 = math.exp %64 : vector<1x8x8xf32>
    %cst_29 = arith.constant dense<0.000000e+00> : vector<1x8xf32>
    %66 = vector.multi_reduction <add>, %65, %cst_29 [2] : vector<1x8x8xf32> to vector<1x8xf32>
    %67 = vector.shape_cast %66 : vector<1x8xf32> to vector<1x8x1xf32>
    %68 = tpu.reciprocal %67 {approx = true} : vector<1x8x1xf32> -> vector<1x8x1xf32>
    %69 = vector.broadcast %68 : vector<1x8x1xf32> to vector<1x8x8xf32>
    %70 = arith.mulf %65, %69 : vector<1x8x8xf32>
    "tpu.trace_start"() <{level = 10 : i32, message = "bts,bsd->btd"}> : () -> ()
    %cst_30 = arith.constant dense<0.000000e+00> : vector<1x8x8xf32>
    %71 = tpu.matmul %70, %54, %cst_30 {dimension_numbers = #tpu.dot_dimension_numbers<[2], [1], [1], [2], [0, 0, 0, 1, 1, 2], [0], [0]>} : vector<1x8x8xf32>, vector<1x8x8xf32>, vector<1x8x8xf32> -> vector<1x8x8xf32>
    "tpu.trace_stop"() : () -> ()
    %72 = vector.extract_strided_slice %7 {offsets = [0, 0, 24], sizes = [1, 8, 8], strides = [1, 1, 1]} : vector<1x8x96xf32> to vector<1x8x8xf32>
    %73 = vector.extract_strided_slice %7 {offsets = [0, 0, 56], sizes = [1, 8, 8], strides = [1, 1, 1]} : vector<1x8x96xf32> to vector<1x8x8xf32>
    %74 = vector.extract_strided_slice %7 {offsets = [0, 0, 88], sizes = [1, 8, 8], strides = [1, 1, 1]} : vector<1x8x96xf32> to vector<1x8x8xf32>
    "tpu.trace_start"() <{level = 10 : i32, message = "btd,bsd->bts"}> : () -> ()
    %cst_31 = arith.constant dense<0.000000e+00> : vector<1x8x8xf32>
    %75 = tpu.matmul %72, %73, %cst_31 {dimension_numbers = #tpu.dot_dimension_numbers<[2], [2], [1], [1], [0, 0, 0, 1, 1, 1], [0], [0]>} : vector<1x8x8xf32>, vector<1x8x8xf32>, vector<1x8x8xf32> -> vector<1x8x8xf32>
    "tpu.trace_stop"() : () -> ()
    %c3 = arith.constant 3 : index
    %c0_32 = arith.constant 0 : index
    %c0_33 = arith.constant 0 : index
    %c0_34 = arith.constant 0 : index
    %76 = vector.load %arg6[%c3, %c0_32, %c0_33, %c0_34] : memref<4x1x8x8xf32, #tpu.memory_space<vmem>>, vector<1x1x8x8xf32>
    %77 = vector.shape_cast %76 : vector<1x1x8x8xf32> to vector<1x8x8xf32>
    %78 = vector.shape_cast %75 : vector<1x8x8xf32> to vector<1x1x8x8xf32>
    tpu.vector_store %arg6[%c3, %c0_32, %c0_33, %c0_34], %78 {strides = array<i32>} : memref<4x1x8x8xf32, #tpu.memory_space<vmem>>, vector<1x1x8x8xf32>,
    %cst_35 = arith.constant -4.2949673E+9 : f32
    %79 = vector.broadcast %cst_35 : f32 to vector<1x8x8xf32>
    %80 = arith.select %11, %75, %79 : vector<1x8x8xi1>, vector<1x8x8xf32>
    %cst_36 = arith.constant dense<0xFF800000> : vector<1x8xf32>
    %81 = vector.multi_reduction <maximumf>, %80, %cst_36 [2] : vector<1x8x8xf32> to vector<1x8xf32>
    %82 = vector.shape_cast %81 : vector<1x8xf32> to vector<1x8x1xf32>
    %83 = vector.broadcast %82 : vector<1x8x1xf32> to vector<1x8x8xf32>
    %84 = arith.subf %80, %83 : vector<1x8x8xf32>
    %85 = math.exp %84 : vector<1x8x8xf32>
    %cst_37 = arith.constant dense<0.000000e+00> : vector<1x8xf32>
    %86 = vector.multi_reduction <add>, %85, %cst_37 [2] : vector<1x8x8xf32> to vector<1x8xf32>
    %87 = vector.shape_cast %86 : vector<1x8xf32> to vector<1x8x1xf32>
    %88 = tpu.reciprocal %87 {approx = true} : vector<1x8x1xf32> -> vector<1x8x1xf32>
    %89 = vector.broadcast %88 : vector<1x8x1xf32> to vector<1x8x8xf32>
    %90 = arith.mulf %85, %89 : vector<1x8x8xf32>
    "tpu.trace_start"() <{level = 10 : i32, message = "bts,bsd->btd"}> : () -> ()
    %cst_38 = arith.constant dense<0.000000e+00> : vector<1x8x8xf32>
    %91 = tpu.matmul %90, %74, %cst_38 {dimension_numbers = #tpu.dot_dimension_numbers<[2], [1], [1], [2], [0, 0, 0, 1, 1, 2], [0], [0]>} : vector<1x8x8xf32>, vector<1x8x8xf32>, vector<1x8x8xf32> -> vector<1x8x8xf32>
    "tpu.trace_stop"() : () -> ()
    %92 = tpu.concatenate %31, %51, %71, %91 in 2 : vector<1x8x8xf32>, vector<1x8x8xf32>, vector<1x8x8xf32>, vector<1x8x8xf32> -> vector<1x8x32xf32>
    %93 = vector.shape_cast %92 : vector<1x8x32xf32> to vector<8x32xf32>
    %c0_39 = arith.constant 0 : index
    %c0_40 = arith.constant 0 : index
    %94 = vector.load %arg4[%c0_39, %c0_40] : memref<32x32xf32, #tpu.memory_space<vmem>>, vector<32x32xf32>
    %cst_41 = arith.constant dense<0.000000e+00> : vector<8x32xf32>
    %95 = tpu.matmul %93, %94, %cst_41 {dimension_numbers = #tpu.dot_dimension_numbers<[1], [0], [0], [1], [0, 0, 1, 1], [], []>} : vector<8x32xf32>, vector<32x32xf32>, vector<8x32xf32> -> vector<8x32xf32>
    %c0_42 = arith.constant 0 : index
    %c0_43 = arith.constant 0 : index
    %96 = vector.load %arg5[%c0_42, %c0_43] : memref<1x32xf32, #tpu.memory_space<vmem>>, vector<1x32xf32>
    %97 = vector.broadcast %96 : vector<1x32xf32> to vector<8x32xf32>
    %98 = arith.addf %95, %97 : vector<8x32xf32>
    %99 = vector.shape_cast %98 : vector<8x32xf32> to vector<1x8x32xf32>
    %c0_44 = arith.constant 0 : index
    %c0_45 = arith.constant 0 : index
    %c0_46 = arith.constant 0 : index
    %100 = vector.load %arg7[%c0_44, %c0_45, %c0_46] : memref<1x8x32xf32, #tpu.memory_space<vmem>>, vector<1x8x32xf32>
    tpu.vector_store %arg7[%c0_44, %c0_45, %c0_46], %99 {strides = array<i32>} : memref<1x8x32xf32, #tpu.memory_space<vmem>>, vector<1x8x32xf32>,
    return
  }
  func.func @transform_0(%arg0: i32) -> (i32, i32, i32) {
    %c0_i32 = arith.constant 0 : i32
    %c0_i32_0 = arith.constant 0 : i32
    %c0_i32_1 = arith.constant 0 : i32
    return %arg0, %c0_i32, %c0_i32_0 : i32, i32, i32
  }
  func.func @transform_1(%arg0: i32) -> (i32, i32) {
    %c0_i32 = arith.constant 0 : i32
    %c0_i32_0 = arith.constant 0 : i32
    %c0_i32_1 = arith.constant 0 : i32
    return %c0_i32, %c0_i32_0 : i32, i32
  }
  func.func @transform_2(%arg0: i32) -> (i32, i32) {
    %c0_i32 = arith.constant 0 : i32
    %c0_i32_0 = arith.constant 0 : i32
    %c0_i32_1 = arith.constant 0 : i32
    return %c0_i32, %c0_i32_0 : i32, i32
  }
  func.func @transform_3(%arg0: i32) -> (i32, i32) {
    %c0_i32 = arith.constant 0 : i32
    %c0_i32_0 = arith.constant 0 : i32
    %c0_i32_1 = arith.constant 0 : i32
    return %c0_i32, %c0_i32_0 : i32, i32
  }
  func.func @transform_4(%arg0: i32) -> (i32, i32) {
    %c0_i32 = arith.constant 0 : i32
    %c0_i32_0 = arith.constant 0 : i32
    %c0_i32_1 = arith.constant 0 : i32
    return %c0_i32, %c0_i32_0 : i32, i32
  }
  func.func @transform_5(%arg0: i32) -> (i32, i32, i32, i32) {
    %c0_i32 = arith.constant 0 : i32
    %c0_i32_0 = arith.constant 0 : i32
    %c0_i32_1 = arith.constant 0 : i32
    %c0_i32_2 = arith.constant 0 : i32
    return %c0_i32, %arg0, %c0_i32_0, %c0_i32_1 : i32, i32, i32, i32
  }
  func.func @transform_6(%arg0: i32) -> (i32, i32, i32) {
    %c0_i32 = arith.constant 0 : i32
    %c0_i32_0 = arith.constant 0 : i32
    %c0_i32_1 = arith.constant 0 : i32
    return %arg0, %c0_i32, %c0_i32_0 : i32, i32, i32
  }
}

</mosaic_0001>

<llo_original>
// kernel: multi_head_attention.1
$region0: #{multi_head_attention.1}
  #allocation0 [shape = 'u32[]', space=smem, size = 0x4, offset = 0x4, fixed_abs, tag = 'smem constant byte address 0x4 - core index']
  #allocation1 [shape = 'u32[144,128]{1,0:T(1,128)}', space=vmem, size = 0x12000, scoped, tag = 'internal scratch']
  %s0 = inlined_call_operand.vmem [shape: f32[2,8,32], index: 0, kind: input, shape index: {}]
  %s1 = inlined_call_operand.vmem [shape: f32[32,96], index: 1, kind: input, shape index: {}]
  %s2 = inlined_call_operand.vmem [shape: f32[1,96], index: 2, kind: input, shape index: {}]
  %s3 = inlined_call_operand.vmem [shape: f32[32,32], index: 3, kind: input, shape index: {}]
  %s4 = inlined_call_operand.vmem [shape: f32[1,32], index: 4, kind: input, shape index: {}]
  %s5 = inlined_call_operand.hbm [shape: f32[4,2,8,8], index: 5, kind: output, shape index: {0}]
  %s6 = inlined_call_operand.hbm [shape: f32[2,8,32], index: 6, kind: output, shape index: {1}]
  %7 = xla_tuple %s5, %s6
  %s8 = sld [smem:[#allocation0]]
  $region61: #{multi_head_attention.1} parent=0
    _
  %s10 = ssub.s32 1, %s8
  %s11 = scalar_select 0, %s10, %s8
  $region1: #{multi_head_attention.1} parent=0
    #allocation2 [shape = 'u8[32768]{0}', space=vmem, size = 0x8000, scoped, tag = 'output window, operand 0']
    #allocation3 [shape = 's32[2]{0}', space=sflag, size = 0x8, scoped, tag = 'scoped memory for multi_head_attention.1']
    #allocation4 [shape = 'u8[8192]{0}', space=vmem, size = 0x2000, scoped, tag = 'output window, operand 1']
    #allocation5 [shape = 's32[2]{0}', space=sflag, size = 0x8, scoped, tag = 'scoped memory for multi_head_attention.1']
    %12 = vsyncpa [#allocation3], 0
    %s13 = scalar_lea.sflag [#allocation3], 1
    %14 = vsyncpa %s13, 0
    %15 = vsyncpa [#allocation5], 0
    %s16 = scalar_lea.sflag [#allocation5], 1
    %17 = vsyncpa %s16, 0
    loop: start=0, step=1, limit=4
    $region2: #{multi_head_attention.1} parent=1 // loop_pre_header
      _
    $region3: #{multi_head_attention.1} parent=1 // loop_header
      %s19 = sphi 0, %s23
      %p20 = scmp.ge.s32.totalorder %s19, 4
      %s29 = sphi 0, %s31
      %s32 = sphi 0, %s29
      %s33 = sphi 0, %s32
      %s49 = sphi 0, %s33
      %s53 = sphi 0, %s53
      %s55 = sphi 0, %s53
      %s56 = sphi 0, %s55
      %s70 = sphi 0, %s56
      %s74 = sphi 0, %s74
      %s76 = sphi 0, %s74
      %s77 = sphi 0, %s76
      %s91 = sphi 0, %s77
      %s95 = sphi 0, %s95
      %s97 = sphi 0, %s95
      %s98 = sphi 0, %s97
      %s112 = sphi 0, %s98
      %s116 = sphi 0, %s116
      %s118 = sphi 0, %s116
      %s119 = sphi 0, %s118
      %s133 = sphi 0, %s119
      %s139 = sphi 0, %s141
      %s142 = sphi 0, %s139
      %s143 = sphi 0, %s142
      %s159 = sphi 0, %s143
      %s165 = sphi 0, %s167
      %s168 = sphi 0, %s165
      %s169 = sphi 0, %s168
      %s185 = sphi 0, %s169
    $region4: #{multi_head_attention.1} parent=1 // loop_header_branch
      %22 = sbr.rel (%p20) target = $region8
    $region5: #{multi_head_attention.1} parent=1 // loop_body
      %s24 = ssub.s32 %s19, 1
      %s25 = ssub.s32 %s19, 2
      %s26 = sadd.s32 %s19, 1
      %s27 = ssub.s32 %s19, %s26
      %p28 = scmp.eq.s32.totalorder %s27, 0
      %s30 = sadd.s32 %s29, 1
      %s31 = scalar_select %p28, %s29, %s30
      %p34 = pneg %p28
      %p35 = scmp.eq.s32.totalorder %s19, 1
      %p36 = por %p34, %p35
      %p37 = scmp.ne.s32.totalorder %s29, %s32
      %p38 = scmp.eq.s32.totalorder %s19, 0
      %p39 = por %p37, %p38
      %p40 = scmp.ne.s32.totalorder %s29, %s32
      %p41 = scmp.eq.s32.totalorder %s24, 1
      %p42 = por %p40, %p41
      %p43 = scmp.ne.s32.totalorder %s32, %s33
      %p44 = scmp.eq.s32.totalorder %s24, 0
      %p45 = por %p43, %p44
      %p46 = scmp.ne.s32.totalorder %s32, %s33
      %p47 = scmp.eq.s32.totalorder %s25, 1
      %p48 = por %p46, %p47
      %p50 = scmp.ne.s32.totalorder %s33, %s49
      %p51 = scmp.eq.s32.totalorder %s25, 0
      %p52 = por %p50, %p51
      %s54 = sadd.s32 %s53, 1
      %p57 = scmp.eq.s32.totalorder %s19, 1
      %p58 = scmp.ne.s32.totalorder %s53, %s55
      %p59 = scmp.eq.s32.totalorder %s19, 0
      %p60 = por %p58, %p59
      %p61 = scmp.ne.s32.totalorder %s53, %s55
      %p62 = scmp.eq.s32.totalorder %s24, 1
      %p63 = por %p61, %p62
      %p64 = scmp.ne.s32.totalorder %s55, %s56
      %p65 = scmp.eq.s32.totalorder %s24, 0
      %p66 = por %p64, %p65
      %p67 = scmp.ne.s32.totalorder %s55, %s56
      %p68 = scmp.eq.s32.totalorder %s25, 1
      %p69 = por %p67, %p68
      %p71 = scmp.ne.s32.totalorder %s56, %s70
      %p72 = scmp.eq.s32.totalorder %s25, 0
      %p73 = por %p71, %p72
      %s75 = sadd.s32 %s74, 1
      %p78 = scmp.eq.s32.totalorder %s19, 1
      %p79 = scmp.ne.s32.totalorder %s74, %s76
      %p80 = scmp.eq.s32.totalorder %s19, 0
      %p81 = por %p79, %p80
      %p82 = scmp.ne.s32.totalorder %s74, %s76
      %p83 = scmp.eq.s32.totalorder %s24, 1
      %p84 = por %p82, %p83
      %p85 = scmp.ne.s32.totalorder %s76, %s77
      %p86 = scmp.eq.s32.totalorder %s24, 0
      %p87 = por %p85, %p86
      %p88 = scmp.ne.s32.totalorder %s76, %s77
      %p89 = scmp.eq.s32.totalorder %s25, 1
      %p90 = por %p88, %p89
      %p92 = scmp.ne.s32.totalorder %s77, %s91
      %p93 = scmp.eq.s32.totalorder %s25, 0
      %p94 = por %p92, %p93
      %s96 = sadd.s32 %s95, 1
      %p99 = scmp.eq.s32.totalorder %s19, 1
      %p100 = scmp.ne.s32.totalorder %s95, %s97
      %p101 = scmp.eq.s32.totalorder %s19, 0
      %p102 = por %p100, %p101
      %p103 = scmp.ne.s32.totalorder %s95, %s97
      %p104 = scmp.eq.s32.totalorder %s24, 1
      %p105 = por %p103, %p104
      %p106 = scmp.ne.s32.totalorder %s97, %s98
      %p107 = scmp.eq.s32.totalorder %s24, 0
      %p108 = por %p106, %p107
      %p109 = scmp.ne.s32.totalorder %s97, %s98
      %p110 = scmp.eq.s32.totalorder %s25, 1
      %p111 = por %p109, %p110
      %p113 = scmp.ne.s32.totalorder %s98, %s112
      %p114 = scmp.eq.s32.totalorder %s25, 0
      %p115 = por %p113, %p114
      %s117 = sadd.s32 %s116, 1
      %p120 = scmp.eq.s32.totalorder %s19, 1
      %p121 = scmp.ne.s32.totalorder %s116, %s118
      %p122 = scmp.eq.s32.totalorder %s19, 0
      %p123 = por %p121, %p122
      %p124 = scmp.ne.s32.totalorder %s116, %s118
      %p125 = scmp.eq.s32.totalorder %s24, 1
      %p126 = por %p124, %p125
      %p127 = scmp.ne.s32.totalorder %s118, %s119
      %p128 = scmp.eq.s32.totalorder %s24, 0
      %p129 = por %p127, %p128
      %p130 = scmp.ne.s32.totalorder %s118, %s119
      %p131 = scmp.eq.s32.totalorder %s25, 1
      %p132 = por %p130, %p131
      %p134 = scmp.ne.s32.totalorder %s119, %s133
      %p135 = scmp.eq.s32.totalorder %s25, 0
      %p136 = por %p134, %p135
      %s137 = ssub.s32 %s19, %s26
      %p138 = scmp.eq.s32.totalorder %s137, 0
      %s140 = sadd.s32 %s139, 1
      %s141 = scalar_select %p138, %s139, %s140
      %p144 = pneg %p138
      %p145 = scmp.eq.s32.totalorder %s19, 1
      %p146 = por %p144, %p145
      %p147 = scmp.ne.s32.totalorder %s139, %s142
      %p148 = scmp.eq.s32.totalorder %s19, 0
      %p149 = por %p147, %p148
      %p150 = scmp.ne.s32.totalorder %s139, %s142
      %p151 = scmp.eq.s32.totalorder %s24, 1
      %p152 = por %p150, %p151
      %p153 = scmp.ne.s32.totalorder %s142, %s143
      %p154 = scmp.eq.s32.totalorder %s24, 0
      %p155 = por %p153, %p154
      %p156 = scmp.ne.s32.totalorder %s142, %s143
      %p157 = scmp.eq.s32.totalorder %s25, 1
      %p158 = por %p156, %p157
      %p160 = scmp.ne.s32.totalorder %s143, %s159
      %p161 = scmp.eq.s32.totalorder %s25, 0
      %p162 = por %p160, %p161
      %s163 = ssub.s32 %s19, %s26
      %p164 = scmp.eq.s32.totalorder %s163, 0
      %s166 = sadd.s32 %s165, 1
      %s167 = scalar_select %p164, %s165, %s166
      %p170 = pneg %p164
      %p171 = scmp.eq.s32.totalorder %s19, 1
      %p172 = por %p170, %p171
      %p173 = scmp.ne.s32.totalorder %s165, %s168
      %p174 = scmp.eq.s32.totalorder %s19, 0
      %p175 = por %p173, %p174
      %p176 = scmp.ne.s32.totalorder %s165, %s168
      %p177 = scmp.eq.s32.totalorder %s24, 1
      %p178 = por %p176, %p177
      %p179 = scmp.ne.s32.totalorder %s168, %s169
      %p180 = scmp.eq.s32.totalorder %s24, 0
      %p181 = por %p179, %p180
      %p182 = scmp.ne.s32.totalorder %s168, %s169
      %p183 = scmp.eq.s32.totalorder %s25, 1
      %p184 = por %p182, %p183
      %p186 = scmp.ne.s32.totalorder %s169, %s185
      %p187 = scmp.eq.s32.totalorder %s25, 0
      %p188 = por %p186, %p187
      %p189 = scmp.le.s32.totalorder 1, %s19
      %p190 = scmp.lt.s32.totalorder %s19, 3
      %p191 = pnand %p189, %p190
      %p192 = pneg %p191
      // Predicated region
      $region9: #{multi_head_attention.1} parent=5 // pred_check
        _
      $region10: #{multi_head_attention.1} parent=5 // pred_check_branch
        %194 = sbr.rel (%p191) target = $region12
      $region11: #{multi_head_attention.1} parent=5 // pred_region
        %s195 = ssub.s32 %s19, 1
        // Predicated region
        $region13: #{multi_head_attention.1} parent=11 // pred_check
          %p196 = pneg %p66
        $region14: #{multi_head_attention.1} parent=11 // pred_check_branch
          %198 = sbr.rel (%p196) target = $region16
        $region15: #{multi_head_attention.1} parent=11 // pred_region
          _
        $region16: #{multi_head_attention.1} parent=11 // pred_fallthru
          _
        // Predicated region
        $region17: #{multi_head_attention.1} parent=11 // pred_check
          %p199 = pneg %p87
        $region18: #{multi_head_attention.1} parent=11 // pred_check_branch
          %201 = sbr.rel (%p199) target = $region20
        $region19: #{multi_head_attention.1} parent=11 // pred_region
          _
        $region20: #{multi_head_attention.1} parent=11 // pred_fallthru
          _
        // Predicated region
        $region21: #{multi_head_attention.1} parent=11 // pred_check
          %p202 = pneg %p108
        $region22: #{multi_head_attention.1} parent=11 // pred_check_branch
          %204 = sbr.rel (%p202) target = $region24
        $region23: #{multi_head_attention.1} parent=11 // pred_region
          _
        $region24: #{multi_head_attention.1} parent=11 // pred_fallthru
          _
        // Predicated region
        $region25: #{multi_head_attention.1} parent=11 // pred_check
          %p205 = pneg %p129
        $region26: #{multi_head_attention.1} parent=11 // pred_check_branch
          %207 = sbr.rel (%p205) target = $region28
        $region27: #{multi_head_attention.1} parent=11 // pred_region
          _
        $region28: #{multi_head_attention.1} parent=11 // pred_fallthru
          _
      $region12: #{multi_head_attention.1} parent=5 // pred_fallthru
        _
      %p208 = scmp.lt.s32.totalorder %s19, 2
      // Predicated region
      $region29: #{multi_head_attention.1} parent=5 // pred_check
        %p209 = pneg %p208
      $region30: #{multi_head_attention.1} parent=5 // pred_check_branch
        %211 = sbr.rel (%p209) target = $region32
      $region31: #{multi_head_attention.1} parent=5 // pred_region
        // Predicated region
        $region33: #{multi_head_attention.1} parent=31 // pred_check
          %p212 = pneg %p39
        $region34: #{multi_head_attention.1} parent=31 // pred_check_branch
          %214 = sbr.rel (%p212) target = $region36
        $region35: #{multi_head_attention.1} parent=31 // pred_region
          %p215 = scmp.lt.s32.totalorder %s19, 1
          %s216 = scalar_select %p215, %s19, 1
          %s217 = smul.addr %s216, 8
          %s218 = scalar_lea.vmem %s0, %s217
        $region36: #{multi_head_attention.1} parent=31 // pred_fallthru
          _
      $region32: #{multi_head_attention.1} parent=5 // pred_fallthru
        _
      %p219 = scmp.le.s32.totalorder 1, %s19
      %p220 = scmp.lt.s32.totalorder %s19, 3
      %p221 = pnand %p219, %p220
      %p222 = pneg %p221
      // Predicated region
      $region37: #{multi_head_attention.1} parent=5 // pred_check
        _
      $region38: #{multi_head_attention.1} parent=5 // pred_check_branch
        %224 = sbr.rel (%p221) target = $region40
      $region39: #{multi_head_attention.1} parent=5 // pred_region
        %s225 = ssub.s32 %s19, 1
        %p226 = scmp.lt.s32.totalorder %s24, 1
        %s227 = scalar_select %p226, %s24, 1
        %s228 = smul.addr %s227, 8
        %s229 = scalar_lea.vmem %s0, %s228
        %p230 = pneg %p45
        %p231 = pneg %p42
        %p232 = pneg %p66
        %p233 = pneg %p63
        %p234 = pneg %p87
        %p235 = pneg %p84
        %p236 = pneg %p108
        %p237 = pneg %p105
        %p238 = pneg %p129
        %p239 = pneg %p126
        %p240 = pneg %p155
        %p241 = pneg %p152
        %s242 = sand.u32 %s142, 1
        %s243 = scalar_lea.sflag [#allocation3], %s242
        %s244 = sand.u32 %s142, 1
        %s245 = smul.addr %s244, 32
        %s246 = scalar_lea.vmem [#allocation2], %s245
        %p247 = pneg %p181
        %p248 = pneg %p178
        %s249 = sand.u32 %s168, 1
        %s250 = scalar_lea.sflag [#allocation5], %s249
        %s251 = sand.u32 %s168, 1
        %s252 = smul.addr %s251, 8
        %s253 = scalar_lea.vmem [#allocation4], %s252
        %p254 = scmp.lt.s32.totalorder %s24, 1
        %s255 = scalar_select %p254, %s24, 1
        %s256 = smul.addr %s255, 8
        %s257 = scalar_lea.vmem %s0, %s256
        %v258 = vld [vmem:[%s257] sm:$0xff]
        %v259 = vld [vmem:[%s1] sm:$0xff]
        %v260 = vld [vmem:[%s1 + $0x8] sm:$0xff]
        %v261 = vld [vmem:[%s1 + $0x10] sm:$0xff]
        %v262 = vld [vmem:[%s1 + $0x18] sm:$0xff]
        %v263 = vld [vmem:[%s2] sm:$0x1]
        %v265 = vlaneseq
        %v266 = vshrl.u32 %v265, 7
        %v267 = vsub.s32 0, %v266
        %v268 = vrot.slane %v263, %v267
        %vm270 = vcmask 261120
        %v272 = vsel %vm270, %v258, 0
        %274 = vmatprep.subr.mxu0 0.0
        %275 = vmatpush1.msra.mxu0 0.0
        %276 = vmatprep.subr.mxu0 0.0
        %277 = vmatpush1.msra.mxu0 0.0
        %278 = vmatprep.subr.mxu0 0.0
        %279 = vmatpush1.msra.mxu0 0.0
        %280 = vmatprep.subr.mxu0 0.0
        %281 = vmatpush1.msra.mxu0 0.0
        %282 = vmatprep.subr.mxu0 0.0
        %283 = vmatpush1.msra.mxu0 0.0
        %284 = vmatprep.subr.mxu0 0.0
        %285 = vmatpush1.msra.mxu0 0.0
        %286 = vmatprep.subr.mxu0 0.0
        %287 = vmatpush1.msra.mxu0 0.0
        %288 = vmatprep.subr.mxu0 0.0
        %289 = vmatpush1.msra.mxu0 0.0
        %290 = vmatprep.subr.mxu0 0.0
        %291 = vmatpush1.msra.mxu0 0.0
        %292 = vmatprep.subr.mxu0 0.0
        %293 = vmatpush1.msra.mxu0 0.0
        %294 = vmatprep.subr.mxu0 0.0
        %295 = vmatpush1.msra.mxu0 0.0
        %296 = vmatprep.subr.mxu0 0.0
        %297 = vmatpush1.msra.mxu0 0.0
        %298 = vmatprep.subr.mxu0 0.0
        %299 = vmatpush1.msra.mxu0 %v262
        %300 = vmatprep.subr.mxu0 0.0
        %301 = vmatpush1.msra.mxu0 %v261
        %302 = vmatprep.subr.mxu0 0.0
        %303 = vmatpush1.msra.mxu0 %v260
        %304 = vmatprep.subr.mxu0 0.0
        %305 = vmatpush1.msra.mxu0 %v259
        %306 = vmatprep.subr.mxu0 0.0
        %307 = vmatpush2.msra.mxu0 0.0
        %308 = vmatprep.subr.mxu0 0.0
        %309 = vmatpush2.msra.mxu0 0.0
        %310 = vmatprep.subr.mxu0 0.0
        %311 = vmatpush2.msra.mxu0 0.0
        %312 = vmatprep.subr.mxu0 0.0
        %313 = vmatpush2.msra.mxu0 0.0
        %314 = vmatprep.subr.mxu0 0.0
        %315 = vmatpush2.msra.mxu0 0.0
        %316 = vmatprep.subr.mxu0 0.0
        %317 = vmatpush2.msra.mxu0 0.0
        %318 = vmatprep.subr.mxu0 0.0
        %319 = vmatpush2.msra.mxu0 0.0
        %320 = vmatprep.subr.mxu0 0.0
        %321 = vmatpush2.msra.mxu0 0.0
        %322 = vmatprep.subr.mxu0 0.0
        %323 = vmatpush2.msra.mxu0 0.0
        %324 = vmatprep.subr.mxu0 0.0
        %325 = vmatpush2.msra.mxu0 0.0
        %326 = vmatprep.subr.mxu0 0.0
        %327 = vmatpush2.msra.mxu0 0.0
        %328 = vmatprep.subr.mxu0 0.0
        %329 = vmatpush2.msra.mxu0 0.0
        %330 = vmatprep.subr.mxu0 0.0
        %331 = vmatpush2.msra.mxu0 0.0
        %332 = vmatprep.subr.mxu0 0.0
        %333 = vmatpush2.msra.mxu0 0.0
        %334 = vmatprep.subr.mxu0 0.0
        %335 = vmatpush2.msra.mxu0 0.0
        %336 = vmatprep.subr.mxu0 0.0
        %337 = vmatpush2.msra.mxu0 0.0
        %338 = vmatprep.mubr.f32.mxu0 0.0
        %339 = vmatmul.mubr.f32.gmra.mxu0 %v272
        %v340 = vpop.f32.mrf.mxu0
        %v341 = vadd.f32 %v268, %v340
        %v342 = vpop.f32.mrf.mxu0
        %343 = vdwg.mxu0
        %v344 = vlaneseq
        %v345 = vshrl.u32 %v344, 7
        %v346 = vlaneseq
        %v347 = vand.u32 %v346, 127
        %vm348 = vcmp.le.s32.totalorder %v347, %v345
        %350 = vrot.lane.b32.xlu0 %v341, 96
        %v351 = vpop.permute.xlu0 %350
        %vm352 = vcmask 64512
        %v353 = vsel %vm352, %v341, 0
        %v355 = vsel %vm352, %v351, 0
        %357 = vmatprep.subr.mxu0 0.0
        %358 = vmatpush1.xpose.msra.mxu0 0.0
        %359 = vmatprep.subr.mxu0 0.0
        %360 = vmatpush1.xpose.msra.mxu0 0.0
        %361 = vmatprep.subr.mxu0 0.0
        %362 = vmatpush1.xpose.msra.mxu0 0.0
        %363 = vmatprep.subr.mxu0 0.0
        %364 = vmatpush1.xpose.msra.mxu0 0.0
        %365 = vmatprep.subr.mxu0 0.0
        %366 = vmatpush1.xpose.msra.mxu0 0.0
        %367 = vmatprep.subr.mxu0 0.0
        %368 = vmatpush1.xpose.msra.mxu0 0.0
        %369 = vmatprep.subr.mxu0 0.0
        %370 = vmatpush1.xpose.msra.mxu0 0.0
        %371 = vmatprep.subr.mxu0 0.0
        %372 = vmatpush1.xpose.msra.mxu0 0.0
        %373 = vmatprep.subr.mxu0 0.0
        %374 = vmatpush1.xpose.msra.mxu0 0.0
        %375 = vmatprep.subr.mxu0 0.0
        %376 = vmatpush1.xpose.msra.mxu0 0.0
        %377 = vmatprep.subr.mxu0 0.0
        %378 = vmatpush1.xpose.msra.mxu0 0.0
        %379 = vmatprep.subr.mxu0 0.0
        %380 = vmatpush1.xpose.msra.mxu0 0.0
        %381 = vmatprep.subr.mxu0 0.0
        %382 = vmatpush1.xpose.msra.mxu0 0.0
        %383 = vmatprep.subr.mxu0 0.0
        %384 = vmatpush1.xpose.msra.mxu0 0.0
        %385 = vmatprep.subr.mxu0 0.0
        %386 = vmatpush1.xpose.msra.mxu0 0.0
        %387 = vmatprep.subr.mxu0 0.0
        %388 = vmatpush1.xpose.msra.mxu0 %v355
        %389 = vmatprep.subr.mxu0 0.0
        %390 = vmatpush2.xpose.msra.mxu0 0.0
        %391 = vmatprep.subr.mxu0 0.0
        %392 = vmatpush2.xpose.msra.mxu0 0.0
        %393 = vmatprep.subr.mxu0 0.0
        %394 = vmatpush2.xpose.msra.mxu0 0.0
        %395 = vmatprep.subr.mxu0 0.0
        %396 = vmatpush2.xpose.msra.mxu0 0.0
        %397 = vmatprep.subr.mxu0 0.0
        %398 = vmatpush2.xpose.msra.mxu0 0.0
        %399 = vmatprep.subr.mxu0 0.0
        %400 = vmatpush2.xpose.msra.mxu0 0.0
        %401 = vmatprep.subr.mxu0 0.0
        %402 = vmatpush2.xpose.msra.mxu0 0.0
        %403 = vmatprep.subr.mxu0 0.0
        %404 = vmatpush2.xpose.msra.mxu0 0.0
        %405 = vmatprep.subr.mxu0 0.0
        %406 = vmatpush2.xpose.msra.mxu0 0.0
        %407 = vmatprep.subr.mxu0 0.0
        %408 = vmatpush2.xpose.msra.mxu0 0.0
        %409 = vmatprep.subr.mxu0 0.0
        %410 = vmatpush2.xpose.msra.mxu0 0.0
        %411 = vmatprep.subr.mxu0 0.0
        %412 = vmatpush2.xpose.msra.mxu0 0.0
        %413 = vmatprep.subr.mxu0 0.0
        %414 = vmatpush2.xpose.msra.mxu0 0.0
        %415 = vmatprep.subr.mxu0 0.0
        %416 = vmatpush2.xpose.msra.mxu0 0.0
        %417 = vmatprep.subr.mxu0 0.0
        %418 = vmatpush2.xpose.msra.mxu0 0.0
        %419 = vmatprep.subr.mxu0 0.0
        %420 = vmatpush2.xpose.msra.mxu0 0.0
        %421 = vmatprep.mubr.f32.mxu0 0.0
        %422 = vmatmul.mubr.f32.gmra.mxu0 %v353
        %v423 = vpop.f32.mrf.mxu0
        %v424 = vadd.f32 0.0, %v423
        %v425 = vpop.f32.mrf.mxu0
        %426 = vdwg.mxu0
        %427 = vst.msk [vmem:[%s246] sm:$0xff] %vm352, %v424
        %v428 = vsel %vm348, %v424, -4.2949673e+09
        %v429 = vsel %vm352, %v428, -inf
        %430 = vmax.xlane.f32.xlu0 %v429
        %v431 = vpop.xlane.xlu0 %430
        %v432 = vsub.f32 %v428, %v431
        %v433 = vmul.f32 %v432, 1.442695
        %v434 = vpow.pop %v433
        %v435 = vsel %vm352, %v434, 0.0
        %436 = vadd.xlane.f32.xlu0 %v435
        %v437 = vpop.xlane.xlu0 %436
        %v438 = vrcp.pop %v437
        %v439 = vmul.f32 %v434, %v438
        %440 = vrot.lane.b32.xlu0 %v341, 64
        %v441 = vpop.permute.xlu0 %440
        %v444 = vsel %vm352, %v439, 0
        %446 = vmatprep.subr.mxu0 0.0
        %447 = vmatpush1.msra.mxu0 0.0
        %448 = vmatprep.subr.mxu0 0.0
        %449 = vmatpush1.msra.mxu0 0.0
        %450 = vmatprep.subr.mxu0 0.0
        %451 = vmatpush1.msra.mxu0 0.0
        %452 = vmatprep.subr.mxu0 0.0
        %453 = vmatpush1.msra.mxu0 0.0
        %454 = vmatprep.subr.mxu0 0.0
        %455 = vmatpush1.msra.mxu0 0.0
        %456 = vmatprep.subr.mxu0 0.0
        %457 = vmatpush1.msra.mxu0 0.0
        %458 = vmatprep.subr.mxu0 0.0
        %459 = vmatpush1.msra.mxu0 0.0
        %460 = vmatprep.subr.mxu0 0.0
        %461 = vmatpush1.msra.mxu0 0.0
        %462 = vmatprep.subr.mxu0 0.0
        %463 = vmatpush1.msra.mxu0 0.0
        %464 = vmatprep.subr.mxu0 0.0
        %465 = vmatpush1.msra.mxu0 0.0
        %466 = vmatprep.subr.mxu0 0.0
        %467 = vmatpush1.msra.mxu0 0.0
        %468 = vmatprep.subr.mxu0 0.0
        %469 = vmatpush1.msra.mxu0 0.0
        %470 = vmatprep.subr.mxu0 0.0
        %471 = vmatpush1.msra.mxu0 0.0
        %472 = vmatprep.subr.mxu0 0.0
        %473 = vmatpush1.msra.mxu0 0.0
        %474 = vmatprep.subr.mxu0 0.0
        %475 = vmatpush1.msra.mxu0 0.0
        %476 = vmatprep.subr.mxu0 0.0
        %477 = vmatpush1.msra.mxu0 %v441
        %478 = vmatprep.subr.mxu0 0.0
        %479 = vmatpush2.msra.mxu0 0.0
        %480 = vmatprep.subr.mxu0 0.0
        %481 = vmatpush2.msra.mxu0 0.0
        %482 = vmatprep.subr.mxu0 0.0
        %483 = vmatpush2.msra.mxu0 0.0
        %484 = vmatprep.subr.mxu0 0.0
        %485 = vmatpush2.msra.mxu0 0.0
        %486 = vmatprep.subr.mxu0 0.0
        %487 = vmatpush2.msra.mxu0 0.0
        %488 = vmatprep.subr.mxu0 0.0
        %489 = vmatpush2.msra.mxu0 0.0
        %490 = vmatprep.subr.mxu0 0.0
        %491 = vmatpush2.msra.mxu0 0.0
        %492 = vmatprep.subr.mxu0 0.0
        %493 = vmatpush2.msra.mxu0 0.0
        %494 = vmatprep.subr.mxu0 0.0
        %495 = vmatpush2.msra.mxu0 0.0
        %496 = vmatprep.subr.mxu0 0.0
        %497 = vmatpush2.msra.mxu0 0.0
        %498 = vmatprep.subr.mxu0 0.0
        %499 = vmatpush2.msra.mxu0 0.0
        %500 = vmatprep.subr.mxu0 0.0
        %501 = vmatpush2.msra.mxu0 0.0
        %502 = vmatprep.subr.mxu0 0.0
        %503 = vmatpush2.msra.mxu0 0.0
        %504 = vmatprep.subr.mxu0 0.0
        %505 = vmatpush2.msra.mxu0 0.0
        %506 = vmatprep.subr.mxu0 0.0
        %507 = vmatpush2.msra.mxu0 0.0
        %508 = vmatprep.subr.mxu0 0.0
        %509 = vmatpush2.msra.mxu0 0.0
        %510 = vmatprep.mubr.f32.mxu0 0.0
        %511 = vmatmul.mubr.f32.gmra.mxu0 %v444
        %v512 = vpop.f32.mrf.mxu0
        %v513 = vadd.f32 0.0, %v512
        %v514 = vpop.f32.mrf.mxu0
        %515 = vdwg.mxu0
        %516 = vrot.lane.b32.xlu0 %v341, 120
        %v517 = vpop.permute.xlu0 %516
        %518 = vrot.lane.b32.xlu0 %v341, 88
        %v519 = vpop.permute.xlu0 %518
        %v520 = vsel %vm352, %v517, 0
        %v522 = vsel %vm352, %v519, 0
        %524 = vmatprep.subr.mxu0 0.0
        %525 = vmatpush1.xpose.msra.mxu0 0.0
        %526 = vmatprep.subr.mxu0 0.0
        %527 = vmatpush1.xpose.msra.mxu0 0.0
        %528 = vmatprep.subr.mxu0 0.0
        %529 = vmatpush1.xpose.msra.mxu0 0.0
        %530 = vmatprep.subr.mxu0 0.0
        %531 = vmatpush1.xpose.msra.mxu0 0.0
        %532 = vmatprep.subr.mxu0 0.0
        %533 = vmatpush1.xpose.msra.mxu0 0.0
        %534 = vmatprep.subr.mxu0 0.0
        %535 = vmatpush1.xpose.msra.mxu0 0.0
        %536 = vmatprep.subr.mxu0 0.0
        %537 = vmatpush1.xpose.msra.mxu0 0.0
        %538 = vmatprep.subr.mxu0 0.0
        %539 = vmatpush1.xpose.msra.mxu0 0.0
        %540 = vmatprep.subr.mxu0 0.0
        %541 = vmatpush1.xpose.msra.mxu0 0.0
        %542 = vmatprep.subr.mxu0 0.0
        %543 = vmatpush1.xpose.msra.mxu0 0.0
        %544 = vmatprep.subr.mxu0 0.0
        %545 = vmatpush1.xpose.msra.mxu0 0.0
        %546 = vmatprep.subr.mxu0 0.0
        %547 = vmatpush1.xpose.msra.mxu0 0.0
        %548 = vmatprep.subr.mxu0 0.0
        %549 = vmatpush1.xpose.msra.mxu0 0.0
        %550 = vmatprep.subr.mxu0 0.0
        %551 = vmatpush1.xpose.msra.mxu0 0.0
        %552 = vmatprep.subr.mxu0 0.0
        %553 = vmatpush1.xpose.msra.mxu0 0.0
        %554 = vmatprep.subr.mxu0 0.0
        %555 = vmatpush1.xpose.msra.mxu0 %v522
        %556 = vmatprep.subr.mxu0 0.0
        %557 = vmatpush2.xpose.msra.mxu0 0.0
        %558 = vmatprep.subr.mxu0 0.0
        %559 = vmatpush2.xpose.msra.mxu0 0.0
        %560 = vmatprep.subr.mxu0 0.0
        %561 = vmatpush2.xpose.msra.mxu0 0.0
        %562 = vmatprep.subr.mxu0 0.0
        %563 = vmatpush2.xpose.msra.mxu0 0.0
        %564 = vmatprep.subr.mxu0 0.0
        %565 = vmatpush2.xpose.msra.mxu0 0.0
        %566 = vmatprep.subr.mxu0 0.0
        %567 = vmatpush2.xpose.msra.mxu0 0.0
        %568 = vmatprep.subr.mxu0 0.0
        %569 = vmatpush2.xpose.msra.mxu0 0.0
        %570 = vmatprep.subr.mxu0 0.0
        %571 = vmatpush2.xpose.msra.mxu0 0.0
        %572 = vmatprep.subr.mxu0 0.0
        %573 = vmatpush2.xpose.msra.mxu0 0.0
        %574 = vmatprep.subr.mxu0 0.0
        %575 = vmatpush2.xpose.msra.mxu0 0.0
        %576 = vmatprep.subr.mxu0 0.0
        %577 = vmatpush2.xpose.msra.mxu0 0.0
        %578 = vmatprep.subr.mxu0 0.0
        %579 = vmatpush2.xpose.msra.mxu0 0.0
        %580 = vmatprep.subr.mxu0 0.0
        %581 = vmatpush2.xpose.msra.mxu0 0.0
        %582 = vmatprep.subr.mxu0 0.0
        %583 = vmatpush2.xpose.msra.mxu0 0.0
        %584 = vmatprep.subr.mxu0 0.0
        %585 = vmatpush2.xpose.msra.mxu0 0.0
        %586 = vmatprep.subr.mxu0 0.0
        %587 = vmatpush2.xpose.msra.mxu0 0.0
        %588 = vmatprep.mubr.f32.mxu0 0.0
        %589 = vmatmul.mubr.f32.gmra.mxu0 %v520
        %v590 = vpop.f32.mrf.mxu0
        %v591 = vadd.f32 0.0, %v590
        %v592 = vpop.f32.mrf.mxu0
        %593 = vdwg.mxu0
        %s594 = scalar_lea.vmem %s246, 8 [#allocation2]
        %595 = vst.msk [vmem:[%s594] sm:$0xff] %vm352, %v591
        %v596 = vsel %vm348, %v591, -4.2949673e+09
        %v597 = vsel %vm352, %v596, -inf
        %598 = vmax.xlane.f32.xlu0 %v597
        %v599 = vpop.xlane.xlu0 %598
        %v600 = vsub.f32 %v596, %v599
        %v601 = vmul.f32 %v600, 1.442695
        %v602 = vpow.pop %v601
        %v603 = vsel %vm352, %v602, 0.0
        %604 = vadd.xlane.f32.xlu0 %v603
        %v605 = vpop.xlane.xlu0 %604
        %v606 = vrcp.pop %v605
        %v607 = vmul.f32 %v602, %v606
        %608 = vrot.lane.b32.xlu0 %v341, 56
        %v609 = vpop.permute.xlu0 %608
        %v612 = vsel %vm352, %v607, 0
        %614 = vmatprep.subr.mxu0 0.0
        %615 = vmatpush1.msra.mxu0 0.0
        %616 = vmatprep.subr.mxu0 0.0
        %617 = vmatpush1.msra.mxu0 0.0
        %618 = vmatprep.subr.mxu0 0.0
        %619 = vmatpush1.msra.mxu0 0.0
        %620 = vmatprep.subr.mxu0 0.0
        %621 = vmatpush1.msra.mxu0 0.0
        %622 = vmatprep.subr.mxu0 0.0
        %623 = vmatpush1.msra.mxu0 0.0
        %624 = vmatprep.subr.mxu0 0.0
        %625 = vmatpush1.msra.mxu0 0.0
        %626 = vmatprep.subr.mxu0 0.0
        %627 = vmatpush1.msra.mxu0 0.0
        %628 = vmatprep.subr.mxu0 0.0
        %629 = vmatpush1.msra.mxu0 0.0
        %630 = vmatprep.subr.mxu0 0.0
        %631 = vmatpush1.msra.mxu0 0.0
        %632 = vmatprep.subr.mxu0 0.0
        %633 = vmatpush1.msra.mxu0 0.0
        %634 = vmatprep.subr.mxu0 0.0
        %635 = vmatpush1.msra.mxu0 0.0
        %636 = vmatprep.subr.mxu0 0.0
        %637 = vmatpush1.msra.mxu0 0.0
        %638 = vmatprep.subr.mxu0 0.0
        %639 = vmatpush1.msra.mxu0 0.0
        %640 = vmatprep.subr.mxu0 0.0
        %641 = vmatpush1.msra.mxu0 0.0
        %642 = vmatprep.subr.mxu0 0.0
        %643 = vmatpush1.msra.mxu0 0.0
        %644 = vmatprep.subr.mxu0 0.0
        %645 = vmatpush1.msra.mxu0 %v609
        %646 = vmatprep.subr.mxu0 0.0
        %647 = vmatpush2.msra.mxu0 0.0
        %648 = vmatprep.subr.mxu0 0.0
        %649 = vmatpush2.msra.mxu0 0.0
        %650 = vmatprep.subr.mxu0 0.0
        %651 = vmatpush2.msra.mxu0 0.0
        %652 = vmatprep.subr.mxu0 0.0
        %653 = vmatpush2.msra.mxu0 0.0
        %654 = vmatprep.subr.mxu0 0.0
        %655 = vmatpush2.msra.mxu0 0.0
        %656 = vmatprep.subr.mxu0 0.0
        %657 = vmatpush2.msra.mxu0 0.0
        %658 = vmatprep.subr.mxu0 0.0
        %659 = vmatpush2.msra.mxu0 0.0
        %660 = vmatprep.subr.mxu0 0.0
        %661 = vmatpush2.msra.mxu0 0.0
        %662 = vmatprep.subr.mxu0 0.0
        %663 = vmatpush2.msra.mxu0 0.0
        %664 = vmatprep.subr.mxu0 0.0
        %665 = vmatpush2.msra.mxu0 0.0
        %666 = vmatprep.subr.mxu0 0.0
        %667 = vmatpush2.msra.mxu0 0.0
        %668 = vmatprep.subr.mxu0 0.0
        %669 = vmatpush2.msra.mxu0 0.0
        %670 = vmatprep.subr.mxu0 0.0
        %671 = vmatpush2.msra.mxu0 0.0
        %672 = vmatprep.subr.mxu0 0.0
        %673 = vmatpush2.msra.mxu0 0.0
        %674 = vmatprep.subr.mxu0 0.0
        %675 = vmatpush2.msra.mxu0 0.0
        %676 = vmatprep.subr.mxu0 0.0
        %677 = vmatpush2.msra.mxu0 0.0
        %678 = vmatprep.mubr.f32.mxu0 0.0
        %679 = vmatmul.mubr.f32.gmra.mxu0 %v612
        %v680 = vpop.f32.mrf.mxu0
        %v681 = vadd.f32 0.0, %v680
        %v682 = vpop.f32.mrf.mxu0
        %683 = vdwg.mxu0
        %684 = vrot.lane.b32.xlu0 %v341, 112
        %v685 = vpop.permute.xlu0 %684
        %686 = vrot.lane.b32.xlu0 %v341, 80
        %v687 = vpop.permute.xlu0 %686
        %v688 = vsel %vm352, %v685, 0
        %v690 = vsel %vm352, %v687, 0
        %692 = vmatprep.subr.mxu0 0.0
        %693 = vmatpush1.xpose.msra.mxu0 0.0
        %694 = vmatprep.subr.mxu0 0.0
        %695 = vmatpush1.xpose.msra.mxu0 0.0
        %696 = vmatprep.subr.mxu0 0.0
        %697 = vmatpush1.xpose.msra.mxu0 0.0
        %698 = vmatprep.subr.mxu0 0.0
        %699 = vmatpush1.xpose.msra.mxu0 0.0
        %700 = vmatprep.subr.mxu0 0.0
        %701 = vmatpush1.xpose.msra.mxu0 0.0
        %702 = vmatprep.subr.mxu0 0.0
        %703 = vmatpush1.xpose.msra.mxu0 0.0
        %704 = vmatprep.subr.mxu0 0.0
        %705 = vmatpush1.xpose.msra.mxu0 0.0
        %706 = vmatprep.subr.mxu0 0.0
        %707 = vmatpush1.xpose.msra.mxu0 0.0
        %708 = vmatprep.subr.mxu0 0.0
        %709 = vmatpush1.xpose.msra.mxu0 0.0
        %710 = vmatprep.subr.mxu0 0.0
        %711 = vmatpush1.xpose.msra.mxu0 0.0
        %712 = vmatprep.subr.mxu0 0.0
        %713 = vmatpush1.xpose.msra.mxu0 0.0
        %714 = vmatprep.subr.mxu0 0.0
        %715 = vmatpush1.xpose.msra.mxu0 0.0
        %716 = vmatprep.subr.mxu0 0.0
        %717 = vmatpush1.xpose.msra.mxu0 0.0
        %718 = vmatprep.subr.mxu0 0.0
        %719 = vmatpush1.xpose.msra.mxu0 0.0
        %720 = vmatprep.subr.mxu0 0.0
        %721 = vmatpush1.xpose.msra.mxu0 0.0
        %722 = vmatprep.subr.mxu0 0.0
        %723 = vmatpush1.xpose.msra.mxu0 %v690
        %724 = vmatprep.subr.mxu0 0.0
        %725 = vmatpush2.xpose.msra.mxu0 0.0
        %726 = vmatprep.subr.mxu0 0.0
        %727 = vmatpush2.xpose.msra.mxu0 0.0
        %728 = vmatprep.subr.mxu0 0.0
        %729 = vmatpush2.xpose.msra.mxu0 0.0
        %730 = vmatprep.subr.mxu0 0.0
        %731 = vmatpush2.xpose.msra.mxu0 0.0
        %732 = vmatprep.subr.mxu0 0.0
        %733 = vmatpush2.xpose.msra.mxu0 0.0
        %734 = vmatprep.subr.mxu0 0.0
        %735 = vmatpush2.xpose.msra.mxu0 0.0
        %736 = vmatprep.subr.mxu0 0.0
        %737 = vmatpush2.xpose.msra.mxu0 0.0
        %738 = vmatprep.subr.mxu0 0.0
        %739 = vmatpush2.xpose.msra.mxu0 0.0
        %740 = vmatprep.subr.mxu0 0.0
        %741 = vmatpush2.xpose.msra.mxu0 0.0
        %742 = vmatprep.subr.mxu0 0.0
        %743 = vmatpush2.xpose.msra.mxu0 0.0
        %744 = vmatprep.subr.mxu0 0.0
        %745 = vmatpush2.xpose.msra.mxu0 0.0
        %746 = vmatprep.subr.mxu0 0.0
        %747 = vmatpush2.xpose.msra.mxu0 0.0
        %748 = vmatprep.subr.mxu0 0.0
        %749 = vmatpush2.xpose.msra.mxu0 0.0
        %750 = vmatprep.subr.mxu0 0.0
        %751 = vmatpush2.xpose.msra.mxu0 0.0
        %752 = vmatprep.subr.mxu0 0.0
        %753 = vmatpush2.xpose.msra.mxu0 0.0
        %754 = vmatprep.subr.mxu0 0.0
        %755 = vmatpush2.xpose.msra.mxu0 0.0
        %756 = vmatprep.mubr.f32.mxu0 0.0
        %757 = vmatmul.mubr.f32.gmra.mxu0 %v688
        %v758 = vpop.f32.mrf.mxu0
        %v759 = vadd.f32 0.0, %v758
        %v760 = vpop.f32.mrf.mxu0
        %761 = vdwg.mxu0
        %s762 = scalar_lea.vmem %s246, 16 [#allocation2]
        %763 = vst.msk [vmem:[%s762] sm:$0xff] %vm352, %v759
        %v764 = vsel %vm348, %v759, -4.2949673e+09
        %v765 = vsel %vm352, %v764, -inf
        %766 = vmax.xlane.f32.xlu0 %v765
        %v767 = vpop.xlane.xlu0 %766
        %v768 = vsub.f32 %v764, %v767
        %v769 = vmul.f32 %v768, 1.442695
        %v770 = vpow.pop %v769
        %v771 = vsel %vm352, %v770, 0.0
        %772 = vadd.xlane.f32.xlu0 %v771
        %v773 = vpop.xlane.xlu0 %772
        %v774 = vrcp.pop %v773
        %v775 = vmul.f32 %v770, %v774
        %776 = vrot.lane.b32.xlu0 %v341, 48
        %v777 = vpop.permute.xlu0 %776
        %v780 = vsel %vm352, %v775, 0
        %782 = vmatprep.subr.mxu0 0.0
        %783 = vmatpush1.msra.mxu0 0.0
        %784 = vmatprep.subr.mxu0 0.0
        %785 = vmatpush1.msra.mxu0 0.0
        %786 = vmatprep.subr.mxu0 0.0
        %787 = vmatpush1.msra.mxu0 0.0
        %788 = vmatprep.subr.mxu0 0.0
        %789 = vmatpush1.msra.mxu0 0.0
        %790 = vmatprep.subr.mxu0 0.0
        %791 = vmatpush1.msra.mxu0 0.0
        %792 = vmatprep.subr.mxu0 0.0
        %793 = vmatpush1.msra.mxu0 0.0
        %794 = vmatprep.subr.mxu0 0.0
        %795 = vmatpush1.msra.mxu0 0.0
        %796 = vmatprep.subr.mxu0 0.0
        %797 = vmatpush1.msra.mxu0 0.0
        %798 = vmatprep.subr.mxu0 0.0
        %799 = vmatpush1.msra.mxu0 0.0
        %800 = vmatprep.subr.mxu0 0.0
        %801 = vmatpush1.msra.mxu0 0.0
        %802 = vmatprep.subr.mxu0 0.0
        %803 = vmatpush1.msra.mxu0 0.0
        %804 = vmatprep.subr.mxu0 0.0
        %805 = vmatpush1.msra.mxu0 0.0
        %806 = vmatprep.subr.mxu0 0.0
        %807 = vmatpush1.msra.mxu0 0.0
        %808 = vmatprep.subr.mxu0 0.0
        %809 = vmatpush1.msra.mxu0 0.0
        %810 = vmatprep.subr.mxu0 0.0
        %811 = vmatpush1.msra.mxu0 0.0
        %812 = vmatprep.subr.mxu0 0.0
        %813 = vmatpush1.msra.mxu0 %v777
        %814 = vmatprep.subr.mxu0 0.0
        %815 = vmatpush2.msra.mxu0 0.0
        %816 = vmatprep.subr.mxu0 0.0
        %817 = vmatpush2.msra.mxu0 0.0
        %818 = vmatprep.subr.mxu0 0.0
        %819 = vmatpush2.msra.mxu0 0.0
        %820 = vmatprep.subr.mxu0 0.0
        %821 = vmatpush2.msra.mxu0 0.0
        %822 = vmatprep.subr.mxu0 0.0
        %823 = vmatpush2.msra.mxu0 0.0
        %824 = vmatprep.subr.mxu0 0.0
        %825 = vmatpush2.msra.mxu0 0.0
        %826 = vmatprep.subr.mxu0 0.0
        %827 = vmatpush2.msra.mxu0 0.0
        %828 = vmatprep.subr.mxu0 0.0
        %829 = vmatpush2.msra.mxu0 0.0
        %830 = vmatprep.subr.mxu0 0.0
        %831 = vmatpush2.msra.mxu0 0.0
        %832 = vmatprep.subr.mxu0 0.0
        %833 = vmatpush2.msra.mxu0 0.0
        %834 = vmatprep.subr.mxu0 0.0
        %835 = vmatpush2.msra.mxu0 0.0
        %836 = vmatprep.subr.mxu0 0.0
        %837 = vmatpush2.msra.mxu0 0.0
        %838 = vmatprep.subr.mxu0 0.0
        %839 = vmatpush2.msra.mxu0 0.0
        %840 = vmatprep.subr.mxu0 0.0
        %841 = vmatpush2.msra.mxu0 0.0
        %842 = vmatprep.subr.mxu0 0.0
        %843 = vmatpush2.msra.mxu0 0.0
        %844 = vmatprep.subr.mxu0 0.0
        %845 = vmatpush2.msra.mxu0 0.0
        %846 = vmatprep.mubr.f32.mxu0 0.0
        %847 = vmatmul.mubr.f32.gmra.mxu0 %v780
        %v848 = vpop.f32.mrf.mxu0
        %v849 = vadd.f32 0.0, %v848
        %v850 = vpop.f32.mrf.mxu0
        %851 = vdwg.mxu0
        %852 = vrot.lane.b32.xlu0 %v341, 104
        %v853 = vpop.permute.xlu0 %852
        %854 = vrot.lane.b32.xlu0 %v341, 72
        %v855 = vpop.permute.xlu0 %854
        %v856 = vsel %vm352, %v853, 0
        %v858 = vsel %vm352, %v855, 0
        %860 = vmatprep.subr.mxu0 0.0
        %861 = vmatpush1.xpose.msra.mxu0 0.0
        %862 = vmatprep.subr.mxu0 0.0
        %863 = vmatpush1.xpose.msra.mxu0 0.0
        %864 = vmatprep.subr.mxu0 0.0
        %865 = vmatpush1.xpose.msra.mxu0 0.0
        %866 = vmatprep.subr.mxu0 0.0
        %867 = vmatpush1.xpose.msra.mxu0 0.0
        %868 = vmatprep.subr.mxu0 0.0
        %869 = vmatpush1.xpose.msra.mxu0 0.0
        %870 = vmatprep.subr.mxu0 0.0
        %871 = vmatpush1.xpose.msra.mxu0 0.0
        %872 = vmatprep.subr.mxu0 0.0
        %873 = vmatpush1.xpose.msra.mxu0 0.0
        %874 = vmatprep.subr.mxu0 0.0
        %875 = vmatpush1.xpose.msra.mxu0 0.0
        %876 = vmatprep.subr.mxu0 0.0
        %877 = vmatpush1.xpose.msra.mxu0 0.0
        %878 = vmatprep.subr.mxu0 0.0
        %879 = vmatpush1.xpose.msra.mxu0 0.0
        %880 = vmatprep.subr.mxu0 0.0
        %881 = vmatpush1.xpose.msra.mxu0 0.0
        %882 = vmatprep.subr.mxu0 0.0
        %883 = vmatpush1.xpose.msra.mxu0 0.0
        %884 = vmatprep.subr.mxu0 0.0
        %885 = vmatpush1.xpose.msra.mxu0 0.0
        %886 = vmatprep.subr.mxu0 0.0
        %887 = vmatpush1.xpose.msra.mxu0 0.0
        %888 = vmatprep.subr.mxu0 0.0
        %889 = vmatpush1.xpose.msra.mxu0 0.0
        %890 = vmatprep.subr.mxu0 0.0
        %891 = vmatpush1.xpose.msra.mxu0 %v858
        %892 = vmatprep.subr.mxu0 0.0
        %893 = vmatpush2.xpose.msra.mxu0 0.0
        %894 = vmatprep.subr.mxu0 0.0
        %895 = vmatpush2.xpose.msra.mxu0 0.0
        %896 = vmatprep.subr.mxu0 0.0
        %897 = vmatpush2.xpose.msra.mxu0 0.0
        %898 = vmatprep.subr.mxu0 0.0
        %899 = vmatpush2.xpose.msra.mxu0 0.0
        %900 = vmatprep.subr.mxu0 0.0
        %901 = vmatpush2.xpose.msra.mxu0 0.0
        %902 = vmatprep.subr.mxu0 0.0
        %903 = vmatpush2.xpose.msra.mxu0 0.0
        %904 = vmatprep.subr.mxu0 0.0
        %905 = vmatpush2.xpose.msra.mxu0 0.0
        %906 = vmatprep.subr.mxu0 0.0
        %907 = vmatpush2.xpose.msra.mxu0 0.0
        %908 = vmatprep.subr.mxu0 0.0
        %909 = vmatpush2.xpose.msra.mxu0 0.0
        %910 = vmatprep.subr.mxu0 0.0
        %911 = vmatpush2.xpose.msra.mxu0 0.0
        %912 = vmatprep.subr.mxu0 0.0
        %913 = vmatpush2.xpose.msra.mxu0 0.0
        %914 = vmatprep.subr.mxu0 0.0
        %915 = vmatpush2.xpose.msra.mxu0 0.0
        %916 = vmatprep.subr.mxu0 0.0
        %917 = vmatpush2.xpose.msra.mxu0 0.0
        %918 = vmatprep.subr.mxu0 0.0
        %919 = vmatpush2.xpose.msra.mxu0 0.0
        %920 = vmatprep.subr.mxu0 0.0
        %921 = vmatpush2.xpose.msra.mxu0 0.0
        %922 = vmatprep.subr.mxu0 0.0
        %923 = vmatpush2.xpose.msra.mxu0 0.0
        %924 = vmatprep.mubr.f32.mxu0 0.0
        %925 = vmatmul.mubr.f32.gmra.mxu0 %v856
        %v926 = vpop.f32.mrf.mxu0
        %v927 = vadd.f32 0.0, %v926
        %v928 = vpop.f32.mrf.mxu0
        %929 = vdwg.mxu0
        %s930 = scalar_lea.vmem %s246, 24 [#allocation2]
        %931 = vst.msk [vmem:[%s930] sm:$0xff] %vm352, %v927
        %v932 = vsel %vm348, %v927, -4.2949673e+09
        %v933 = vsel %vm352, %v932, -inf
        %934 = vmax.xlane.f32.xlu0 %v933
        %v935 = vpop.xlane.xlu0 %934
        %v936 = vsub.f32 %v932, %v935
        %v937 = vmul.f32 %v936, 1.442695
        %v938 = vpow.pop %v937
        %v939 = vsel %vm352, %v938, 0.0
        %940 = vadd.xlane.f32.xlu0 %v939
        %v941 = vpop.xlane.xlu0 %940
        %v942 = vrcp.pop %v941
        %v943 = vmul.f32 %v938, %v942
        %944 = vrot.lane.b32.xlu0 %v341, 40
        %v945 = vpop.permute.xlu0 %944
        %v948 = vsel %vm352, %v943, 0
        %950 = vmatprep.subr.mxu0 0.0
        %951 = vmatpush1.msra.mxu0 0.0
        %952 = vmatprep.subr.mxu0 0.0
        %953 = vmatpush1.msra.mxu0 0.0
        %954 = vmatprep.subr.mxu0 0.0
        %955 = vmatpush1.msra.mxu0 0.0
        %956 = vmatprep.subr.mxu0 0.0
        %957 = vmatpush1.msra.mxu0 0.0
        %958 = vmatprep.subr.mxu0 0.0
        %959 = vmatpush1.msra.mxu0 0.0
        %960 = vmatprep.subr.mxu0 0.0
        %961 = vmatpush1.msra.mxu0 0.0
        %962 = vmatprep.subr.mxu0 0.0
        %963 = vmatpush1.msra.mxu0 0.0
        %964 = vmatprep.subr.mxu0 0.0
        %965 = vmatpush1.msra.mxu0 0.0
        %966 = vmatprep.subr.mxu0 0.0
        %967 = vmatpush1.msra.mxu0 0.0
        %968 = vmatprep.subr.mxu0 0.0
        %969 = vmatpush1.msra.mxu0 0.0
        %970 = vmatprep.subr.mxu0 0.0
        %971 = vmatpush1.msra.mxu0 0.0
        %972 = vmatprep.subr.mxu0 0.0
        %973 = vmatpush1.msra.mxu0 0.0
        %974 = vmatprep.subr.mxu0 0.0
        %975 = vmatpush1.msra.mxu0 0.0
        %976 = vmatprep.subr.mxu0 0.0
        %977 = vmatpush1.msra.mxu0 0.0
        %978 = vmatprep.subr.mxu0 0.0
        %979 = vmatpush1.msra.mxu0 0.0
        %980 = vmatprep.subr.mxu0 0.0
        %981 = vmatpush1.msra.mxu0 %v945
        %982 = vmatprep.subr.mxu0 0.0
        %983 = vmatpush2.msra.mxu0 0.0
        %984 = vmatprep.subr.mxu0 0.0
        %985 = vmatpush2.msra.mxu0 0.0
        %986 = vmatprep.subr.mxu0 0.0
        %987 = vmatpush2.msra.mxu0 0.0
        %988 = vmatprep.subr.mxu0 0.0
        %989 = vmatpush2.msra.mxu0 0.0
        %990 = vmatprep.subr.mxu0 0.0
        %991 = vmatpush2.msra.mxu0 0.0
        %992 = vmatprep.subr.mxu0 0.0
        %993 = vmatpush2.msra.mxu0 0.0
        %994 = vmatprep.subr.mxu0 0.0
        %995 = vmatpush2.msra.mxu0 0.0
        %996 = vmatprep.subr.mxu0 0.0
        %997 = vmatpush2.msra.mxu0 0.0
        %998 = vmatprep.subr.mxu0 0.0
        %999 = vmatpush2.msra.mxu0 0.0
        %1000 = vmatprep.subr.mxu0 0.0
        %1001 = vmatpush2.msra.mxu0 0.0
        %1002 = vmatprep.subr.mxu0 0.0
        %1003 = vmatpush2.msra.mxu0 0.0
        %1004 = vmatprep.subr.mxu0 0.0
        %1005 = vmatpush2.msra.mxu0 0.0
        %1006 = vmatprep.subr.mxu0 0.0
        %1007 = vmatpush2.msra.mxu0 0.0
        %1008 = vmatprep.subr.mxu0 0.0
        %1009 = vmatpush2.msra.mxu0 0.0
        %1010 = vmatprep.subr.mxu0 0.0
        %1011 = vmatpush2.msra.mxu0 0.0
        %1012 = vmatprep.subr.mxu0 0.0
        %1013 = vmatpush2.msra.mxu0 0.0
        %1014 = vmatprep.mubr.f32.mxu0 0.0
        %1015 = vmatmul.mubr.f32.gmra.mxu0 %v948
        %v1016 = vpop.f32.mrf.mxu0
        %v1017 = vadd.f32 0.0, %v1016
        %v1018 = vpop.f32.mrf.mxu0
        %1019 = vdwg.mxu0
        %1021 = vrot.lane.b32.xlu0 %v681, 8
        %v1022 = vpop.permute.xlu0 %1021
        %1025 = vrot.lane.b32.xlu0 %v849, 16
        %v1026 = vpop.permute.xlu0 %1025
        %1029 = vrot.lane.b32.xlu0 %v1017, 24
        %v1030 = vpop.permute.xlu0 %1029
        %v1032 = vsel %vm352, %v513, %v1022
        %vm1033 = vcmask 130048
        %v1034 = vsel %vm1033, %v1032, %v1026
        %vm1035 = vcmask 195584
        %v1036 = vsel %vm1035, %v1034, %v1030
        %v1037 = vld [vmem:[%s3] sm:$0xff]
        %v1038 = vld [vmem:[%s3 + $0x8] sm:$0xff]
        %v1039 = vld [vmem:[%s3 + $0x10] sm:$0xff]
        %v1040 = vld [vmem:[%s3 + $0x18] sm:$0xff]
        %v1041 = vld [vmem:[%s4] sm:$0x1]
        %v1043 = vlaneseq
        %v1044 = vshrl.u32 %v1043, 7
        %v1045 = vsub.s32 0, %v1044
        %v1046 = vrot.slane %v1041, %v1045
        %v1049 = vsel %vm270, %v1036, 0
        %1051 = vmatprep.subr.mxu0 0.0
        %1052 = vmatpush1.msra.mxu0 0.0
        %1053 = vmatprep.subr.mxu0 0.0
        %1054 = vmatpush1.msra.mxu0 0.0
        %1055 = vmatprep.subr.mxu0 0.0
        %1056 = vmatpush1.msra.mxu0 0.0
        %1057 = vmatprep.subr.mxu0 0.0
        %1058 = vmatpush1.msra.mxu0 0.0
        %1059 = vmatprep.subr.mxu0 0.0
        %1060 = vmatpush1.msra.mxu0 0.0
        %1061 = vmatprep.subr.mxu0 0.0
        %1062 = vmatpush1.msra.mxu0 0.0
        %1063 = vmatprep.subr.mxu0 0.0
        %1064 = vmatpush1.msra.mxu0 0.0
        %1065 = vmatprep.subr.mxu0 0.0
        %1066 = vmatpush1.msra.mxu0 0.0
        %1067 = vmatprep.subr.mxu0 0.0
        %1068 = vmatpush1.msra.mxu0 0.0
        %1069 = vmatprep.subr.mxu0 0.0
        %1070 = vmatpush1.msra.mxu0 0.0
        %1071 = vmatprep.subr.mxu0 0.0
        %1072 = vmatpush1.msra.mxu0 0.0
        %1073 = vmatprep.subr.mxu0 0.0
        %1074 = vmatpush1.msra.mxu0 0.0
        %1075 = vmatprep.subr.mxu0 0.0
        %1076 = vmatpush1.msra.mxu0 %v1040
        %1077 = vmatprep.subr.mxu0 0.0
        %1078 = vmatpush1.msra.mxu0 %v1039
        %1079 = vmatprep.subr.mxu0 0.0
        %1080 = vmatpush1.msra.mxu0 %v1038
        %1081 = vmatprep.subr.mxu0 0.0
        %1082 = vmatpush1.msra.mxu0 %v1037
        %1083 = vmatprep.subr.mxu0 0.0
        %1084 = vmatpush2.msra.mxu0 0.0
        %1085 = vmatprep.subr.mxu0 0.0
        %1086 = vmatpush2.msra.mxu0 0.0
        %1087 = vmatprep.subr.mxu0 0.0
        %1088 = vmatpush2.msra.mxu0 0.0
        %1089 = vmatprep.subr.mxu0 0.0
        %1090 = vmatpush2.msra.mxu0 0.0
        %1091 = vmatprep.subr.mxu0 0.0
        %1092 = vmatpush2.msra.mxu0 0.0
        %1093 = vmatprep.subr.mxu0 0.0
        %1094 = vmatpush2.msra.mxu0 0.0
        %1095 = vmatprep.subr.mxu0 0.0
        %1096 = vmatpush2.msra.mxu0 0.0
        %1097 = vmatprep.subr.mxu0 0.0
        %1098 = vmatpush2.msra.mxu0 0.0
        %1099 = vmatprep.subr.mxu0 0.0
        %1100 = vmatpush2.msra.mxu0 0.0
        %1101 = vmatprep.subr.mxu0 0.0
        %1102 = vmatpush2.msra.mxu0 0.0
        %1103 = vmatprep.subr.mxu0 0.0
        %1104 = vmatpush2.msra.mxu0 0.0
        %1105 = vmatprep.subr.mxu0 0.0
        %1106 = vmatpush2.msra.mxu0 0.0
        %1107 = vmatprep.subr.mxu0 0.0
        %1108 = vmatpush2.msra.mxu0 0.0
        %1109 = vmatprep.subr.mxu0 0.0
        %1110 = vmatpush2.msra.mxu0 0.0
        %1111 = vmatprep.subr.mxu0 0.0
        %1112 = vmatpush2.msra.mxu0 0.0
        %1113 = vmatprep.subr.mxu0 0.0
        %1114 = vmatpush2.msra.mxu0 0.0
        %1115 = vmatprep.mubr.f32.mxu0 0.0
        %1116 = vmatmul.mubr.f32.gmra.mxu0 %v1049
        %v1117 = vpop.f32.mrf.mxu0
        %v1118 = vadd.f32 %v1046, %v1117
        %v1119 = vpop.f32.mrf.mxu0
        %1120 = vdwg.mxu0
        %1121 = vst.msk [vmem:[%s253] sm:$0xff] %vm270, %v1118
        %s1122 = sand.u32 %s142, 1
        %s1123 = scalar_lea.sflag [#allocation3], %s1122
        %s1124 = sand.u32 %s142, 1
        %s1125 = smul.addr %s1124, 32
        %s1126 = scalar_lea.vmem [#allocation2], %s1125
        %s1127 = sand.u32 %s168, 1
        %s1128 = scalar_lea.sflag [#allocation5], %s1127
        %s1129 = sand.u32 %s168, 1
        %s1130 = smul.addr %s1129, 8
        %s1131 = scalar_lea.vmem [#allocation4], %s1130
        // Predicated region
        $region41: #{multi_head_attention.1} parent=39 // pred_check
          %p1132 = pneg %p152
        $region42: #{multi_head_attention.1} parent=39 // pred_check_branch
          %1134 = sbr.rel (%p1132) target = $region44
        $region43: #{multi_head_attention.1} parent=39 // pred_region
          %s1136 = ssub.s32 512, 512
          %1137 = vsyncadd %s1123, %s1136
          %s1138 = smul.addr %s24, 128
          %s1139 = scalar_lea.hbm %s5, %s1138
          %s1140 = sshll.u32 %s1126, 4
          %s1141 = int_to_ptr.vmem [resolvable:$true] %s1140
          %1146 = dma.vmem_to_hbm [thread:$0]  %s1141, 512, %s1139, %s1123, 128, 256, 8
        $region44: #{multi_head_attention.1} parent=39 // pred_fallthru
          _
        // Predicated region
        $region45: #{multi_head_attention.1} parent=39 // pred_check
          %p1147 = pneg %p178
        $region46: #{multi_head_attention.1} parent=39 // pred_check_branch
          %1149 = sbr.rel (%p1147) target = $region48
        $region47: #{multi_head_attention.1} parent=39 // pred_region
          %s1151 = ssub.s32 128, 128
          %1152 = vsyncadd %s1128, %s1151
          %s1153 = smul.addr %s24, 128
          %s1154 = scalar_lea.hbm %s6, %s1153
          %s1156 = sshll.u32 %s1131, 4
          %s1157 = int_to_ptr.vmem [resolvable:$true] %s1156
          %1159 = dma.vmem_to_hbm [thread:$0]  %s1157, 128, %s1154, %s1128
        $region48: #{multi_head_attention.1} parent=39 // pred_fallthru
          _
      $region40: #{multi_head_attention.1} parent=5 // pred_fallthru
        _
      %p1160 = scmp.le.s32.totalorder 2, %s19
      // Predicated region
      $region49: #{multi_head_attention.1} parent=5 // pred_check
        %p1161 = pneg %p1160
      $region50: #{multi_head_attention.1} parent=5 // pred_check_branch
        %1163 = sbr.rel (%p1161) target = $region52
      $region51: #{multi_head_attention.1} parent=5 // pred_region
        %s1164 = ssub.s32 %s19, 2
        // Predicated region
        $region53: #{multi_head_attention.1} parent=51 // pred_check
          %p1165 = pneg %p158
        $region54: #{multi_head_attention.1} parent=51 // pred_check_branch
          %1167 = sbr.rel (%p1165) target = $region56
        $region55: #{multi_head_attention.1} parent=51 // pred_region
          %s1168 = sand.u32 %s143, 1
          %s1169 = scalar_lea.sflag [#allocation3], %s1168
          %s1170 = sand.u32 %s143, 1
          %s1171 = smul.addr %s1170, 32
          %s1172 = scalar_lea.vmem [#allocation2], %s1171
          %1173 = dma.done %s1169, 512
        $region56: #{multi_head_attention.1} parent=51 // pred_fallthru
          _
        // Predicated region
        $region57: #{multi_head_attention.1} parent=51 // pred_check
          %p1174 = pneg %p184
        $region58: #{multi_head_attention.1} parent=51 // pred_check_branch
          %1176 = sbr.rel (%p1174) target = $region60
        $region59: #{multi_head_attention.1} parent=51 // pred_region
          %s1177 = sand.u32 %s169, 1
          %s1178 = scalar_lea.sflag [#allocation5], %s1177
          %s1179 = sand.u32 %s169, 1
          %s1180 = smul.addr %s1179, 8
          %s1181 = scalar_lea.vmem [#allocation4], %s1180
          %1182 = dma.done %s1178, 128
        $region60: #{multi_head_attention.1} parent=51 // pred_fallthru
          _
      $region52: #{multi_head_attention.1} parent=5 // pred_fallthru
        _
    $region6: #{multi_head_attention.1} parent=1 // loop_footer
      %s23 = sadd.s32 1, %s19
    $region7: #{multi_head_attention.1} parent=1 // loop_footer_branch
      %18 = sbr.rel target = $region3
    $region8: #{multi_head_attention.1} parent=1 // loop_exit
      _
    %1183 = vsyncpa [#allocation3], 1
    %s1184 = scalar_lea.sflag [#allocation3], 1
    %1185 = vsyncpa %s1184, 1
    %1186 = vsyncpa [#allocation5], 1
    %s1187 = scalar_lea.sflag [#allocation5], 1
    %1188 = vsyncpa %s1187, 1

</llo_original>
